<compile_context>
chip_gen: v7x
topology: tpu7x:2x2x1
jax: 0.10.0
libtpu: 0.0.40
codegen_flags: <defaults>
</compile_context>

<pallas_src>
import functools
import numpy as np

import jax
import jax.numpy as jnp
from jax.experimental import pallas as pl
from jax.experimental.pallas import tpu as pltpu


# ----------------------------------------------------------------------------
# Fused kernel: dconv1 + dconv2 (dilated 3x3, BN-folded, PReLU) + 1x1 fuse + sigmoid
# ----------------------------------------------------------------------------
def mlp_kernel(x_ref, w_ref, wf_ref, p_ref, o_ref, *, H, W, dil1, dil2):
    # x_ref : (1, C, HW)       bf16  one image, channels x flattened spatial
    # w_ref : (2, 9, C/2, C)   bf16  dilated-conv taps (BN scale folded), t=(ky+1)*3+(kx+1)
    # wf_ref: (2, Cout, C/2)   bf16  1x1 fuse weight split for [d1 | d2]
    # p_ref : (2, 2, C/2, 1)   f32   [conv][shift, prelu_alpha][channel]
    # o_ref : (1, Cout, HW)    f32
    c_half = w_ref.shape[2]
    hw = x_ref.shape[2]

    x = x_ref[0]                                          # (C, HW) bf16

    # Row / column coordinate of every flattened spatial position (exact small ints
    # represented in f32; avoids integer div/mod lowering). Computed once, reused by
    # both conv branches.
    p = jax.lax.broadcasted_iota(jnp.int32, (1, hw), 1).astype(jnp.float32)
    py = jnp.floor((p + 0.5) / float(W))                  # row index    (1, HW)
    px = p - py * float(W)                                # column index (1, HW)

    def dilated_conv(ci, d):
        # Boundary-validity masks, one per axis offset (shared across the 3 taps of a
        # kernel row / column) instead of recomputed per tap.
        vx = {kx: (px + float(d * kx) >= 0.0) & (px + float(d * kx) <= float(W - 1))
              for kx in (-1, 1)}
        vy = {ky: (py + float(d * ky) >= 0.0) & (py + float(d * ky) <= float(H - 1))
              for ky in (-1, 1)}

        acc = jnp.zeros((c_half, hw), jnp.float32)
        t = 0
        for ky in (-1, 0, 1):
            for kx in (-1, 0, 1):
                off = d * (ky * W + kx)
                # Lane rotation so that xs[:, p] == x[:, p + off] (the dilated neighbor).
                xs = x if off == 0 else jnp.roll(x, -off, axis=-1)
                prod = jnp.dot(w_ref[ci, t], xs, preferred_element_type=jnp.float32)
                valid = None
                if kx != 0:
                    valid = vx[kx]
                if ky != 0:
                    valid = vy[ky] if valid is None else (valid & vy[ky])
                if valid is not None:
                    # Zero contributions whose neighbor falls outside the image
                    # (zero padding of the conv); also kills lane-wraparound garbage.
                    prod = jnp.where(valid, prod, 0.0)
                acc = acc + prod
                t += 1
        return acc

    a1 = dilated_conv(0, dil1)                            # (C/2, HW) f32
    a2 = dilated_conv(1, dil2)                            # (C/2, HW) f32

    # BN shift (scale already folded into weights) + PReLU, in f32
    v1 = a1 + p_ref[0, 0]
    d1 = jnp.where(v1 >= 0.0, v1, p_ref[0, 1] * v1)
    v2 = a2 + p_ref[1, 0]
    d2 = jnp.where(v2 >= 0.0, v2, p_ref[1, 1] * v2)

    # 1x1 fuse conv over cat([d1, d2], channel) expressed as a split matmul
    # (avoids materializing the channel concat in VMEM).
    fz = (jnp.dot(wf_ref[0], d1.astype(jnp.bfloat16), preferred_element_type=jnp.float32)
          + jnp.dot(wf_ref[1], d2.astype(jnp.bfloat16), preferred_element_type=jnp.float32))

    # sigmoid (EUP); Dropout(p=0.0) is the identity
    o_ref[0] = jax.nn.sigmoid(fz).astype(o_ref.dtype)


# ----------------------------------------------------------------------------
# Module wrapper: deterministic parameters + pallas_call plumbing
# ----------------------------------------------------------------------------
class MlpPallas:
    def __init__(self, in_features, out_features=None, key=None):
        out_features = out_features or in_features
        self.cin = in_features
        self.ch = in_features // 2
        self.cout = out_features
        key = key if key is not None else jax.random.PRNGKey(0)
        ks = jax.random.split(key, 5)

        def conv_init(k, co, ci, kh, kw):
            bound = 1.0 / np.sqrt(ci * kh * kw)
            return jax.random.uniform(k, (co, ci, kh, kw), jnp.float32, -bound, bound)

        # Raw conv weights in PyTorch OIHW layout
        self.w1 = conv_init(ks[0], self.ch, self.cin, 3, 3)
        self.w2 = conv_init(ks[1], self.ch, self.cin, 3, 3)
        self.wf = conv_init(ks[2], self.cout, self.cin, 1, 1)

        # BatchNorm (inference running stats) + PReLU parameters; randomized
        # deterministically so the affine / activation paths are actually exercised.
        def bn_prelu(k):
            kg, kb, km, kv, ka = jax.random.split(k, 5)
            gamma = jax.random.uniform(kg, (self.ch,), jnp.float32, 0.5, 1.5)
            beta = 0.1 * jax.random.normal(kb, (self.ch,), jnp.float32)
            mean = 0.1 * jax.random.normal(km, (self.ch,), jnp.float32)
            var = jax.random.uniform(kv, (self.ch,), jnp.float32, 0.5, 1.5)
            alpha = jax.random.uniform(ka, (self.ch,), jnp.float32, 0.1, 0.4)
            return gamma, beta, mean, var, alpha

        self.eps = 1e-5
        (self.gamma1, self.beta1, self.mean1, self.var1, self.alpha1) = bn_prelu(ks[3])
        (self.gamma2, self.beta2, self.mean2, self.var2, self.alpha2) = bn_prelu(ks[4])

        scale1 = self.gamma1 / jnp.sqrt(self.var1 + self.eps)
        scale2 = self.gamma2 / jnp.sqrt(self.var2 + self.eps)
        shift1 = self.beta1 - self.mean1 * scale1
        shift2 = self.beta2 - self.mean2 * scale2

        # Fold BN scale into the conv weights, then lay out taps for the kernel:
        # (C/2, C, 3, 3) -> (3, 3, C/2, C) -> (9, C/2, C), tap t = (ky+1)*3 + (kx+1);
        # stack both convs into a single (2, 9, C/2, C) side input.
        w1f = self.w1 * scale1[:, None, None, None]
        w2f = self.w2 * scale2[:, None, None, None]
        w1_taps = jnp.transpose(w1f, (2, 3, 0, 1)).reshape(9, self.ch, self.cin)
        w2_taps = jnp.transpose(w2f, (2, 3, 0, 1)).reshape(9, self.ch, self.cin)
        self.w_taps = jnp.stack([w1_taps, w2_taps], axis=0).astype(jnp.bfloat16)

        wf2d = self.wf[:, :, 0, 0]                                 # (Cout, C)
        self.wf_split = jnp.stack(
            [wf2d[:, :self.ch], wf2d[:, self.ch:]], axis=0).astype(jnp.bfloat16)

        # (2 convs, 2 params [shift, alpha], C/2, 1) -- single tiny side input
        self.pparams = jnp.stack(
            [jnp.stack([shift1, self.alpha1]), jnp.stack([shift2, self.alpha2])]
        )[..., None].astype(jnp.float32)

    def __call__(self, x_nchw):
        n, c, h, w = x_nchw.shape
        assert c == self.cin
        hw = h * w
        # Free reshape (no relayout); bf16 halves the dominant HBM read inside the kernel.
        x_flat = x_nchw.reshape(n, c, hw).astype(jnp.bfloat16)

        kernel = functools.partial(mlp_kernel, H=h, W=w, dil1=2, dil2=4)
        ch, cout = self.ch, self.cout

        grid_spec = pltpu.PrefetchScalarGridSpec(
            num_scalar_prefetch=0,
            grid=(n,),
            in_specs=[
                pl.BlockSpec((1, c, hw), lambda i: (i, 0, 0)),        # x (one image)
                pl.BlockSpec((2, 9, ch, c), lambda i: (0, 0, 0, 0)),  # dconv taps (both)
                pl.BlockSpec((2, cout, ch), lambda i: (0, 0, 0)),     # fuse weight (split)
                pl.BlockSpec((2, 2, ch, 1), lambda i: (0, 0, 0, 0)),  # shift / alpha
            ],
            out_specs=pl.BlockSpec((1, cout, hw), lambda i: (i, 0, 0)),
        )

        out = pl.pallas_call(
            kernel,
            out_shape=jax.ShapeDtypeStruct((n, cout, hw), jnp.float32),
            grid_spec=grid_spec,
            compiler_params=pltpu.CompilerParams(
                dimension_semantics=("parallel",)),
        )(x_flat, self.w_taps, self.wf_split, self.pparams)

        return out.reshape(n, cout, h, w)


# ----------------------------------------------------------------------------
# Pure-JAX float32 reference (independent: explicit dilated convs, BN, PReLU)
# ----------------------------------------------------------------------------
def mlp_reference(mlp, x):
    dn = ("NCHW", "OIHW", "NCHW")
    hi = jax.lax.Precision.HIGHEST

    def branch(w, gamma, beta, mean, var, alpha, d):
        z = jax.lax.conv_general_dilated(
            x, w, (1, 1), ((d, d), (d, d)), rhs_dilation=(d, d),
            dimension_numbers=dn, precision=hi)
        z = (z - mean[None, :, None, None]) / jnp.sqrt(var[None, :, None, None] + mlp.eps)
        z = z * gamma[None, :, None, None] + beta[None, :, None, None]
        return jnp.where(z >= 0, z, alpha[None, :, None, None] * z)

    d1 = branch(mlp.w1, mlp.gamma1, mlp.beta1, mlp.mean1, mlp.var1, mlp.alpha1, 2)
    d2 = branch(mlp.w2, mlp.gamma2, mlp.beta2, mlp.mean2, mlp.var2, mlp.alpha2, 4)
    dd = jnp.concatenate([d1, d2], axis=1)
    fz = jax.lax.conv_general_dilated(
        dd, mlp.wf, (1, 1), ((0, 0), (0, 0)), dimension_numbers=dn, precision=hi)
    return jax.nn.sigmoid(fz)   # Dropout(p=0.0) is identity


if __name__ == "__main__":
    key = jax.random.PRNGKey(0)
    kparam, kx = jax.random.split(key)

    in_features = 32            # C  (C/2 = 16); out_features defaults to in_features
    n, h, w = 2, 16, 16

    mlp = MlpPallas(in_features, key=kparam)
    x = jax.random.normal(kx, (n, in_features, h, w), jnp.float32)

    out = mlp(x)
    out = jax.block_until_ready(out)

    ref = mlp_reference(mlp, x)
    assert out.shape == (n, in_features, h, w)
    # bf16 input/weight streams in the kernel vs f32 reference -> relaxed tolerance.
    np.testing.assert_allclose(np.asarray(out), np.asarray(ref), rtol=2e-2, atol=2e-2)

    print("KERNEL_OK")
</pallas_src>

<mosaic_0001>
module attributes {stable_mosaic.version = 11 : i64} {
  func.func @mlp_kernel(%arg0: i32, %arg1: memref<1x32x256xbf16, #tpu.memory_space<vmem>>, %arg2: memref<2x9x16x32xbf16, #tpu.memory_space<vmem>>, %arg3: memref<2x32x16xbf16, #tpu.memory_space<vmem>>, %arg4: memref<2x2x16x1xf32, #tpu.memory_space<vmem>>, %arg5: memref<1x32x256xf32, #tpu.memory_space<vmem>>) attributes {dimension_semantics = [#tpu.dimension_semantics<parallel>], iteration_bounds = array<i64: 2>, scalar_prefetch = 0 : i64, scratch_operands = 0 : i64, tpu.core_type = #tpu.core_type<tc>, window_params = [{transform_indices = @transform_0, window_bounds = array<i64: 1, 32, 256>}, {pipeline_mode = #tpu.pipeline_mode<synchronous>, transform_indices = @transform_1, window_bounds = array<i64: 2, 9, 16, 32>}, {pipeline_mode = #tpu.pipeline_mode<synchronous>, transform_indices = @transform_2, window_bounds = array<i64: 2, 32, 16>}, {pipeline_mode = #tpu.pipeline_mode<synchronous>, transform_indices = @transform_3, window_bounds = array<i64: 2, 2, 16, 1>}, {transform_indices = @transform_4, window_bounds = array<i64: 1, 32, 256>}]} {
    %c0 = arith.constant 0 : index
    %c0_0 = arith.constant 0 : index
    %c0_1 = arith.constant 0 : index
    %0 = vector.load %arg1[%c0, %c0_0, %c0_1] : memref<1x32x256xbf16, #tpu.memory_space<vmem>>, vector<1x32x256xbf16>
    %1 = vector.shape_cast %0 : vector<1x32x256xbf16> to vector<32x256xbf16>
    %2 = tpu.iota {dimensions = array<i32: 1>} : vector<1x256xi32>
    %3 = arith.sitofp %2 : vector<1x256xi32> to vector<1x256xf32>
    %cst = arith.constant 5.000000e-01 : f32
    %4 = vector.broadcast %cst : f32 to vector<1x256xf32>
    %5 = arith.addf %3, %4 : vector<1x256xf32>
    %cst_2 = arith.constant 1.600000e+01 : f32
    %6 = vector.broadcast %cst_2 : f32 to vector<1x256xf32>
    %7 = arith.divf %5, %6 : vector<1x256xf32>
    %8 = math.floor %7 : vector<1x256xf32>
    %cst_3 = arith.constant 1.600000e+01 : f32
    %9 = vector.broadcast %cst_3 : f32 to vector<1x256xf32>
    %10 = arith.mulf %8, %9 : vector<1x256xf32>
    %11 = arith.subf %3, %10 : vector<1x256xf32>
    %cst_4 = arith.constant -2.000000e+00 : f32
    %12 = vector.broadcast %cst_4 : f32 to vector<1x256xf32>
    %13 = arith.addf %11, %12 : vector<1x256xf32>
    %cst_5 = arith.constant 0.000000e+00 : f32
    %14 = vector.broadcast %cst_5 : f32 to vector<1x256xf32>
    %15 = arith.cmpf oge, %13, %14 : vector<1x256xf32>
    %cst_6 = arith.constant -2.000000e+00 : f32
    %16 = vector.broadcast %cst_6 : f32 to vector<1x256xf32>
    %17 = arith.addf %11, %16 : vector<1x256xf32>
    %cst_7 = arith.constant 1.500000e+01 : f32
    %18 = vector.broadcast %cst_7 : f32 to vector<1x256xf32>
    %19 = arith.cmpf ole, %17, %18 : vector<1x256xf32>
    %20 = arith.andi %15, %19 : vector<1x256xi1>
    %cst_8 = arith.constant 2.000000e+00 : f32
    %21 = vector.broadcast %cst_8 : f32 to vector<1x256xf32>
    %22 = arith.addf %11, %21 : vector<1x256xf32>
    %cst_9 = arith.constant 0.000000e+00 : f32
    %23 = vector.broadcast %cst_9 : f32 to vector<1x256xf32>
    %24 = arith.cmpf oge, %22, %23 : vector<1x256xf32>
    %cst_10 = arith.constant 2.000000e+00 : f32
    %25 = vector.broadcast %cst_10 : f32 to vector<1x256xf32>
    %26 = arith.addf %11, %25 : vector<1x256xf32>
    %cst_11 = arith.constant 1.500000e+01 : f32
    %27 = vector.broadcast %cst_11 : f32 to vector<1x256xf32>
    %28 = arith.cmpf ole, %26, %27 : vector<1x256xf32>
    %29 = arith.andi %24, %28 : vector<1x256xi1>
    %cst_12 = arith.constant -2.000000e+00 : f32
    %30 = vector.broadcast %cst_12 : f32 to vector<1x256xf32>
    %31 = arith.addf %8, %30 : vector<1x256xf32>
    %cst_13 = arith.constant 0.000000e+00 : f32
    %32 = vector.broadcast %cst_13 : f32 to vector<1x256xf32>
    %33 = arith.cmpf oge, %31, %32 : vector<1x256xf32>
    %cst_14 = arith.constant -2.000000e+00 : f32
    %34 = vector.broadcast %cst_14 : f32 to vector<1x256xf32>
    %35 = arith.addf %8, %34 : vector<1x256xf32>
    %cst_15 = arith.constant 1.500000e+01 : f32
    %36 = vector.broadcast %cst_15 : f32 to vector<1x256xf32>
    %37 = arith.cmpf ole, %35, %36 : vector<1x256xf32>
    %38 = arith.andi %33, %37 : vector<1x256xi1>
    %cst_16 = arith.constant 2.000000e+00 : f32
    %39 = vector.broadcast %cst_16 : f32 to vector<1x256xf32>
    %40 = arith.addf %8, %39 : vector<1x256xf32>
    %cst_17 = arith.constant 0.000000e+00 : f32
    %41 = vector.broadcast %cst_17 : f32 to vector<1x256xf32>
    %42 = arith.cmpf oge, %40, %41 : vector<1x256xf32>
    %cst_18 = arith.constant 2.000000e+00 : f32
    %43 = vector.broadcast %cst_18 : f32 to vector<1x256xf32>
    %44 = arith.addf %8, %43 : vector<1x256xf32>
    %cst_19 = arith.constant 1.500000e+01 : f32
    %45 = vector.broadcast %cst_19 : f32 to vector<1x256xf32>
    %46 = arith.cmpf ole, %44, %45 : vector<1x256xf32>
    %47 = arith.andi %42, %46 : vector<1x256xi1>
    %cst_20 = arith.constant 0.000000e+00 : f32
    %48 = vector.broadcast %cst_20 : f32 to vector<16x256xf32>
    %49 = vector.extract_strided_slice %1 {offsets = [0, 222], sizes = [32, 34], strides = [1, 1]} : vector<32x256xbf16> to vector<32x34xbf16>
    %50 = vector.extract_strided_slice %1 {offsets = [0, 0], sizes = [32, 222], strides = [1, 1]} : vector<32x256xbf16> to vector<32x222xbf16>
    %51 = tpu.concatenate %49, %50 in 1 : vector<32x34xbf16>, vector<32x222xbf16> -> vector<32x256xbf16>
    %c0_21 = arith.constant 0 : index
    %c0_22 = arith.constant 0 : index
    %c0_23 = arith.constant 0 : index
    %c0_24 = arith.constant 0 : index
    %52 = vector.load %arg2[%c0_21, %c0_22, %c0_23, %c0_24] : memref<2x9x16x32xbf16, #tpu.memory_space<vmem>>, vector<1x1x16x32xbf16>
    %53 = vector.shape_cast %52 : vector<1x1x16x32xbf16> to vector<16x32xbf16>
    %cst_25 = arith.constant dense<0.000000e+00> : vector<16x256xf32>
    %54 = tpu.matmul %53, %51, %cst_25 {dimension_numbers = #tpu.dot_dimension_numbers<[1], [0], [0], [1], [0, 0, 1, 1], [], []>} : vector<16x32xbf16>, vector<32x256xbf16>, vector<16x256xf32> -> vector<16x256xf32>
    %55 = arith.andi %20, %38 : vector<1x256xi1>
    %cst_26 = arith.constant 0.000000e+00 : f32
    %56 = vector.shape_cast %55 : vector<1x256xi1> to vector<1x256xi1>
    %57 = vector.broadcast %56 : vector<1x256xi1> to vector<16x256xi1>
    %58 = vector.broadcast %cst_26 : f32 to vector<16x256xf32>
    %59 = arith.select %57, %54, %58 : vector<16x256xi1>, vector<16x256xf32>
    %60 = arith.addf %48, %59 : vector<16x256xf32>
    %61 = vector.extract_strided_slice %1 {offsets = [0, 224], sizes = [32, 32], strides = [1, 1]} : vector<32x256xbf16> to vector<32x32xbf16>
    %62 = vector.extract_strided_slice %1 {offsets = [0, 0], sizes = [32, 224], strides = [1, 1]} : vector<32x256xbf16> to vector<32x224xbf16>
    %63 = tpu.concatenate %61, %62 in 1 : vector<32x32xbf16>, vector<32x224xbf16> -> vector<32x256xbf16>
    %c0_27 = arith.constant 0 : index
    %c1 = arith.constant 1 : index
    %c0_28 = arith.constant 0 : index
    %c0_29 = arith.constant 0 : index
    %64 = vector.load %arg2[%c0_27, %c1, %c0_28, %c0_29] : memref<2x9x16x32xbf16, #tpu.memory_space<vmem>>, vector<1x1x16x32xbf16>
    %65 = vector.shape_cast %64 : vector<1x1x16x32xbf16> to vector<16x32xbf16>
    %cst_30 = arith.constant dense<0.000000e+00> : vector<16x256xf32>
    %66 = tpu.matmul %65, %63, %cst_30 {dimension_numbers = #tpu.dot_dimension_numbers<[1], [0], [0], [1], [0, 0, 1, 1], [], []>} : vector<16x32xbf16>, vector<32x256xbf16>, vector<16x256xf32> -> vector<16x256xf32>
    %cst_31 = arith.constant 0.000000e+00 : f32
    %67 = vector.shape_cast %38 : vector<1x256xi1> to vector<1x256xi1>
    %68 = vector.broadcast %67 : vector<1x256xi1> to vector<16x256xi1>
    %69 = vector.broadcast %cst_31 : f32 to vector<16x256xf32>
    %70 = arith.select %68, %66, %69 : vector<16x256xi1>, vector<16x256xf32>
    %71 = arith.addf %60, %70 : vector<16x256xf32>
    %72 = vector.extract_strided_slice %1 {offsets = [0, 226], sizes = [32, 30], strides = [1, 1]} : vector<32x256xbf16> to vector<32x30xbf16>
    %73 = vector.extract_strided_slice %1 {offsets = [0, 0], sizes = [32, 226], strides = [1, 1]} : vector<32x256xbf16> to vector<32x226xbf16>
    %74 = tpu.concatenate %72, %73 in 1 : vector<32x30xbf16>, vector<32x226xbf16> -> vector<32x256xbf16>
    %c0_32 = arith.constant 0 : index
    %c2 = arith.constant 2 : index
    %c0_33 = arith.constant 0 : index
    %c0_34 = arith.constant 0 : index
    %75 = vector.load %arg2[%c0_32, %c2, %c0_33, %c0_34] : memref<2x9x16x32xbf16, #tpu.memory_space<vmem>>, vector<1x1x16x32xbf16>
    %76 = vector.shape_cast %75 : vector<1x1x16x32xbf16> to vector<16x32xbf16>
    %cst_35 = arith.constant dense<0.000000e+00> : vector<16x256xf32>
    %77 = tpu.matmul %76, %74, %cst_35 {dimension_numbers = #tpu.dot_dimension_numbers<[1], [0], [0], [1], [0, 0, 1, 1], [], []>} : vector<16x32xbf16>, vector<32x256xbf16>, vector<16x256xf32> -> vector<16x256xf32>
    %78 = arith.andi %29, %38 : vector<1x256xi1>
    %cst_36 = arith.constant 0.000000e+00 : f32
    %79 = vector.shape_cast %78 : vector<1x256xi1> to vector<1x256xi1>
    %80 = vector.broadcast %79 : vector<1x256xi1> to vector<16x256xi1>
    %81 = vector.broadcast %cst_36 : f32 to vector<16x256xf32>
    %82 = arith.select %80, %77, %81 : vector<16x256xi1>, vector<16x256xf32>
    %83 = arith.addf %71, %82 : vector<16x256xf32>
    %84 = vector.extract_strided_slice %1 {offsets = [0, 254], sizes = [32, 2], strides = [1, 1]} : vector<32x256xbf16> to vector<32x2xbf16>
    %85 = vector.extract_strided_slice %1 {offsets = [0, 0], sizes = [32, 254], strides = [1, 1]} : vector<32x256xbf16> to vector<32x254xbf16>
    %86 = tpu.concatenate %84, %85 in 1 : vector<32x2xbf16>, vector<32x254xbf16> -> vector<32x256xbf16>
    %c0_37 = arith.constant 0 : index
    %c3 = arith.constant 3 : index
    %c0_38 = arith.constant 0 : index
    %c0_39 = arith.constant 0 : index
    %87 = vector.load %arg2[%c0_37, %c3, %c0_38, %c0_39] : memref<2x9x16x32xbf16, #tpu.memory_space<vmem>>, vector<1x1x16x32xbf16>
    %88 = vector.shape_cast %87 : vector<1x1x16x32xbf16> to vector<16x32xbf16>
    %cst_40 = arith.constant dense<0.000000e+00> : vector<16x256xf32>
    %89 = tpu.matmul %88, %86, %cst_40 {dimension_numbers = #tpu.dot_dimension_numbers<[1], [0], [0], [1], [0, 0, 1, 1], [], []>} : vector<16x32xbf16>, vector<32x256xbf16>, vector<16x256xf32> -> vector<16x256xf32>
    %cst_41 = arith.constant 0.000000e+00 : f32
    %90 = vector.shape_cast %20 : vector<1x256xi1> to vector<1x256xi1>
    %91 = vector.broadcast %90 : vector<1x256xi1> to vector<16x256xi1>
    %92 = vector.broadcast %cst_41 : f32 to vector<16x256xf32>
    %93 = arith.select %91, %89, %92 : vector<16x256xi1>, vector<16x256xf32>
    %94 = arith.addf %83, %93 : vector<16x256xf32>
    %c0_42 = arith.constant 0 : index
    %c4 = arith.constant 4 : index
    %c0_43 = arith.constant 0 : index
    %c0_44 = arith.constant 0 : index
    %95 = vector.load %arg2[%c0_42, %c4, %c0_43, %c0_44] : memref<2x9x16x32xbf16, #tpu.memory_space<vmem>>, vector<1x1x16x32xbf16>
    %96 = vector.shape_cast %95 : vector<1x1x16x32xbf16> to vector<16x32xbf16>
    %cst_45 = arith.constant dense<0.000000e+00> : vector<16x256xf32>
    %97 = tpu.matmul %96, %1, %cst_45 {dimension_numbers = #tpu.dot_dimension_numbers<[1], [0], [0], [1], [0, 0, 1, 1], [], []>} : vector<16x32xbf16>, vector<32x256xbf16>, vector<16x256xf32> -> vector<16x256xf32>
    %98 = arith.addf %94, %97 : vector<16x256xf32>
    %99 = vector.extract_strided_slice %1 {offsets = [0, 2], sizes = [32, 254], strides = [1, 1]} : vector<32x256xbf16> to vector<32x254xbf16>
    %100 = vector.extract_strided_slice %1 {offsets = [0, 0], sizes = [32, 2], strides = [1, 1]} : vector<32x256xbf16> to vector<32x2xbf16>
    %101 = tpu.concatenate %99, %100 in 1 : vector<32x254xbf16>, vector<32x2xbf16> -> vector<32x256xbf16>
    %c0_46 = arith.constant 0 : index
    %c5 = arith.constant 5 : index
    %c0_47 = arith.constant 0 : index
    %c0_48 = arith.constant 0 : index
    %102 = vector.load %arg2[%c0_46, %c5, %c0_47, %c0_48] : memref<2x9x16x32xbf16, #tpu.memory_space<vmem>>, vector<1x1x16x32xbf16>
    %103 = vector.shape_cast %102 : vector<1x1x16x32xbf16> to vector<16x32xbf16>
    %cst_49 = arith.constant dense<0.000000e+00> : vector<16x256xf32>
    %104 = tpu.matmul %103, %101, %cst_49 {dimension_numbers = #tpu.dot_dimension_numbers<[1], [0], [0], [1], [0, 0, 1, 1], [], []>} : vector<16x32xbf16>, vector<32x256xbf16>, vector<16x256xf32> -> vector<16x256xf32>
    %cst_50 = arith.constant 0.000000e+00 : f32
    %105 = vector.shape_cast %29 : vector<1x256xi1> to vector<1x256xi1>
    %106 = vector.broadcast %105 : vector<1x256xi1> to vector<16x256xi1>
    %107 = vector.broadcast %cst_50 : f32 to vector<16x256xf32>
    %108 = arith.select %106, %104, %107 : vector<16x256xi1>, vector<16x256xf32>
    %109 = arith.addf %98, %108 : vector<16x256xf32>
    %110 = vector.extract_strided_slice %1 {offsets = [0, 30], sizes = [32, 226], strides = [1, 1]} : vector<32x256xbf16> to vector<32x226xbf16>
    %111 = vector.extract_strided_slice %1 {offsets = [0, 0], sizes = [32, 30], strides = [1, 1]} : vector<32x256xbf16> to vector<32x30xbf16>
    %112 = tpu.concatenate %110, %111 in 1 : vector<32x226xbf16>, vector<32x30xbf16> -> vector<32x256xbf16>
    %c0_51 = arith.constant 0 : index
    %c6 = arith.constant 6 : index
    %c0_52 = arith.constant 0 : index
    %c0_53 = arith.constant 0 : index
    %113 = vector.load %arg2[%c0_51, %c6, %c0_52, %c0_53] : memref<2x9x16x32xbf16, #tpu.memory_space<vmem>>, vector<1x1x16x32xbf16>
    %114 = vector.shape_cast %113 : vector<1x1x16x32xbf16> to vector<16x32xbf16>
    %cst_54 = arith.constant dense<0.000000e+00> : vector<16x256xf32>
    %115 = tpu.matmul %114, %112, %cst_54 {dimension_numbers = #tpu.dot_dimension_numbers<[1], [0], [0], [1], [0, 0, 1, 1], [], []>} : vector<16x32xbf16>, vector<32x256xbf16>, vector<16x256xf32> -> vector<16x256xf32>
    %116 = arith.andi %20, %47 : vector<1x256xi1>
    %cst_55 = arith.constant 0.000000e+00 : f32
    %117 = vector.shape_cast %116 : vector<1x256xi1> to vector<1x256xi1>
    %118 = vector.broadcast %117 : vector<1x256xi1> to vector<16x256xi1>
    %119 = vector.broadcast %cst_55 : f32 to vector<16x256xf32>
    %120 = arith.select %118, %115, %119 : vector<16x256xi1>, vector<16x256xf32>
    %121 = arith.addf %109, %120 : vector<16x256xf32>
    %122 = vector.extract_strided_slice %1 {offsets = [0, 32], sizes = [32, 224], strides = [1, 1]} : vector<32x256xbf16> to vector<32x224xbf16>
    %123 = vector.extract_strided_slice %1 {offsets = [0, 0], sizes = [32, 32], strides = [1, 1]} : vector<32x256xbf16> to vector<32x32xbf16>
    %124 = tpu.concatenate %122, %123 in 1 : vector<32x224xbf16>, vector<32x32xbf16> -> vector<32x256xbf16>
    %c0_56 = arith.constant 0 : index
    %c7 = arith.constant 7 : index
    %c0_57 = arith.constant 0 : index
    %c0_58 = arith.constant 0 : index
    %125 = vector.load %arg2[%c0_56, %c7, %c0_57, %c0_58] : memref<2x9x16x32xbf16, #tpu.memory_space<vmem>>, vector<1x1x16x32xbf16>
    %126 = vector.shape_cast %125 : vector<1x1x16x32xbf16> to vector<16x32xbf16>
    %cst_59 = arith.constant dense<0.000000e+00> : vector<16x256xf32>
    %127 = tpu.matmul %126, %124, %cst_59 {dimension_numbers = #tpu.dot_dimension_numbers<[1], [0], [0], [1], [0, 0, 1, 1], [], []>} : vector<16x32xbf16>, vector<32x256xbf16>, vector<16x256xf32> -> vector<16x256xf32>
    %cst_60 = arith.constant 0.000000e+00 : f32
    %128 = vector.shape_cast %47 : vector<1x256xi1> to vector<1x256xi1>
    %129 = vector.broadcast %128 : vector<1x256xi1> to vector<16x256xi1>
    %130 = vector.broadcast %cst_60 : f32 to vector<16x256xf32>
    %131 = arith.select %129, %127, %130 : vector<16x256xi1>, vector<16x256xf32>
    %132 = arith.addf %121, %131 : vector<16x256xf32>
    %133 = vector.extract_strided_slice %1 {offsets = [0, 34], sizes = [32, 222], strides = [1, 1]} : vector<32x256xbf16> to vector<32x222xbf16>
    %134 = vector.extract_strided_slice %1 {offsets = [0, 0], sizes = [32, 34], strides = [1, 1]} : vector<32x256xbf16> to vector<32x34xbf16>
    %135 = tpu.concatenate %133, %134 in 1 : vector<32x222xbf16>, vector<32x34xbf16> -> vector<32x256xbf16>
    %c0_61 = arith.constant 0 : index
    %c8 = arith.constant 8 : index
    %c0_62 = arith.constant 0 : index
    %c0_63 = arith.constant 0 : index
    %136 = vector.load %arg2[%c0_61, %c8, %c0_62, %c0_63] : memref<2x9x16x32xbf16, #tpu.memory_space<vmem>>, vector<1x1x16x32xbf16>
    %137 = vector.shape_cast %136 : vector<1x1x16x32xbf16> to vector<16x32xbf16>
    %cst_64 = arith.constant dense<0.000000e+00> : vector<16x256xf32>
    %138 = tpu.matmul %137, %135, %cst_64 {dimension_numbers = #tpu.dot_dimension_numbers<[1], [0], [0], [1], [0, 0, 1, 1], [], []>} : vector<16x32xbf16>, vector<32x256xbf16>, vector<16x256xf32> -> vector<16x256xf32>
    %139 = arith.andi %29, %47 : vector<1x256xi1>
    %cst_65 = arith.constant 0.000000e+00 : f32
    %140 = vector.shape_cast %139 : vector<1x256xi1> to vector<1x256xi1>
    %141 = vector.broadcast %140 : vector<1x256xi1> to vector<16x256xi1>
    %142 = vector.broadcast %cst_65 : f32 to vector<16x256xf32>
    %143 = arith.select %141, %138, %142 : vector<16x256xi1>, vector<16x256xf32>
    %144 = arith.addf %132, %143 : vector<16x256xf32>
    %cst_66 = arith.constant -4.000000e+00 : f32
    %145 = vector.broadcast %cst_66 : f32 to vector<1x256xf32>
    %146 = arith.addf %11, %145 : vector<1x256xf32>
    %cst_67 = arith.constant 0.000000e+00 : f32
    %147 = vector.broadcast %cst_67 : f32 to vector<1x256xf32>
    %148 = arith.cmpf oge, %146, %147 : vector<1x256xf32>
    %cst_68 = arith.constant -4.000000e+00 : f32
    %149 = vector.broadcast %cst_68 : f32 to vector<1x256xf32>
    %150 = arith.addf %11, %149 : vector<1x256xf32>
    %cst_69 = arith.constant 1.500000e+01 : f32
    %151 = vector.broadcast %cst_69 : f32 to vector<1x256xf32>
    %152 = arith.cmpf ole, %150, %151 : vector<1x256xf32>
    %153 = arith.andi %148, %152 : vector<1x256xi1>
    %cst_70 = arith.constant 4.000000e+00 : f32
    %154 = vector.broadcast %cst_70 : f32 to vector<1x256xf32>
    %155 = arith.addf %11, %154 : vector<1x256xf32>
    %cst_71 = arith.constant 0.000000e+00 : f32
    %156 = vector.broadcast %cst_71 : f32 to vector<1x256xf32>
    %157 = arith.cmpf oge, %155, %156 : vector<1x256xf32>
    %cst_72 = arith.constant 4.000000e+00 : f32
    %158 = vector.broadcast %cst_72 : f32 to vector<1x256xf32>
    %159 = arith.addf %11, %158 : vector<1x256xf32>
    %cst_73 = arith.constant 1.500000e+01 : f32
    %160 = vector.broadcast %cst_73 : f32 to vector<1x256xf32>
    %161 = arith.cmpf ole, %159, %160 : vector<1x256xf32>
    %162 = arith.andi %157, %161 : vector<1x256xi1>
    %cst_74 = arith.constant -4.000000e+00 : f32
    %163 = vector.broadcast %cst_74 : f32 to vector<1x256xf32>
    %164 = arith.addf %8, %163 : vector<1x256xf32>
    %cst_75 = arith.constant 0.000000e+00 : f32
    %165 = vector.broadcast %cst_75 : f32 to vector<1x256xf32>
    %166 = arith.cmpf oge, %164, %165 : vector<1x256xf32>
    %cst_76 = arith.constant -4.000000e+00 : f32
    %167 = vector.broadcast %cst_76 : f32 to vector<1x256xf32>
    %168 = arith.addf %8, %167 : vector<1x256xf32>
    %cst_77 = arith.constant 1.500000e+01 : f32
    %169 = vector.broadcast %cst_77 : f32 to vector<1x256xf32>
    %170 = arith.cmpf ole, %168, %169 : vector<1x256xf32>
    %171 = arith.andi %166, %170 : vector<1x256xi1>
    %cst_78 = arith.constant 4.000000e+00 : f32
    %172 = vector.broadcast %cst_78 : f32 to vector<1x256xf32>
    %173 = arith.addf %8, %172 : vector<1x256xf32>
    %cst_79 = arith.constant 0.000000e+00 : f32
    %174 = vector.broadcast %cst_79 : f32 to vector<1x256xf32>
    %175 = arith.cmpf oge, %173, %174 : vector<1x256xf32>
    %cst_80 = arith.constant 4.000000e+00 : f32
    %176 = vector.broadcast %cst_80 : f32 to vector<1x256xf32>
    %177 = arith.addf %8, %176 : vector<1x256xf32>
    %cst_81 = arith.constant 1.500000e+01 : f32
    %178 = vector.broadcast %cst_81 : f32 to vector<1x256xf32>
    %179 = arith.cmpf ole, %177, %178 : vector<1x256xf32>
    %180 = arith.andi %175, %179 : vector<1x256xi1>
    %cst_82 = arith.constant 0.000000e+00 : f32
    %181 = vector.broadcast %cst_82 : f32 to vector<16x256xf32>
    %182 = vector.extract_strided_slice %1 {offsets = [0, 188], sizes = [32, 68], strides = [1, 1]} : vector<32x256xbf16> to vector<32x68xbf16>
    %183 = vector.extract_strided_slice %1 {offsets = [0, 0], sizes = [32, 188], strides = [1, 1]} : vector<32x256xbf16> to vector<32x188xbf16>
    %184 = tpu.concatenate %182, %183 in 1 : vector<32x68xbf16>, vector<32x188xbf16> -> vector<32x256xbf16>
    %c1_83 = arith.constant 1 : index
    %c0_84 = arith.constant 0 : index
    %c0_85 = arith.constant 0 : index
    %c0_86 = arith.constant 0 : index
    %185 = vector.load %arg2[%c1_83, %c0_84, %c0_85, %c0_86] : memref<2x9x16x32xbf16, #tpu.memory_space<vmem>>, vector<1x1x16x32xbf16>
    %186 = vector.shape_cast %185 : vector<1x1x16x32xbf16> to vector<16x32xbf16>
    %cst_87 = arith.constant dense<0.000000e+00> : vector<16x256xf32>
    %187 = tpu.matmul %186, %184, %cst_87 {dimension_numbers = #tpu.dot_dimension_numbers<[1], [0], [0], [1], [0, 0, 1, 1], [], []>} : vector<16x32xbf16>, vector<32x256xbf16>, vector<16x256xf32> -> vector<16x256xf32>
    %188 = arith.andi %153, %171 : vector<1x256xi1>
    %cst_88 = arith.constant 0.000000e+00 : f32
    %189 = vector.shape_cast %188 : vector<1x256xi1> to vector<1x256xi1>
    %190 = vector.broadcast %189 : vector<1x256xi1> to vector<16x256xi1>
    %191 = vector.broadcast %cst_88 : f32 to vector<16x256xf32>
    %192 = arith.select %190, %187, %191 : vector<16x256xi1>, vector<16x256xf32>
    %193 = arith.addf %181, %192 : vector<16x256xf32>
    %194 = vector.extract_strided_slice %1 {offsets = [0, 192], sizes = [32, 64], strides = [1, 1]} : vector<32x256xbf16> to vector<32x64xbf16>
    %195 = vector.extract_strided_slice %1 {offsets = [0, 0], sizes = [32, 192], strides = [1, 1]} : vector<32x256xbf16> to vector<32x192xbf16>
    %196 = tpu.concatenate %194, %195 in 1 : vector<32x64xbf16>, vector<32x192xbf16> -> vector<32x256xbf16>
    %c1_89 = arith.constant 1 : index
    %c1_90 = arith.constant 1 : index
    %c0_91 = arith.constant 0 : index
    %c0_92 = arith.constant 0 : index
    %197 = vector.load %arg2[%c1_89, %c1_90, %c0_91, %c0_92] : memref<2x9x16x32xbf16, #tpu.memory_space<vmem>>, vector<1x1x16x32xbf16>
    %198 = vector.shape_cast %197 : vector<1x1x16x32xbf16> to vector<16x32xbf16>
    %cst_93 = arith.constant dense<0.000000e+00> : vector<16x256xf32>
    %199 = tpu.matmul %198, %196, %cst_93 {dimension_numbers = #tpu.dot_dimension_numbers<[1], [0], [0], [1], [0, 0, 1, 1], [], []>} : vector<16x32xbf16>, vector<32x256xbf16>, vector<16x256xf32> -> vector<16x256xf32>
    %cst_94 = arith.constant 0.000000e+00 : f32
    %200 = vector.shape_cast %171 : vector<1x256xi1> to vector<1x256xi1>
    %201 = vector.broadcast %200 : vector<1x256xi1> to vector<16x256xi1>
    %202 = vector.broadcast %cst_94 : f32 to vector<16x256xf32>
    %203 = arith.select %201, %199, %202 : vector<16x256xi1>, vector<16x256xf32>
    %204 = arith.addf %193, %203 : vector<16x256xf32>
    %205 = vector.extract_strided_slice %1 {offsets = [0, 196], sizes = [32, 60], strides = [1, 1]} : vector<32x256xbf16> to vector<32x60xbf16>
    %206 = vector.extract_strided_slice %1 {offsets = [0, 0], sizes = [32, 196], strides = [1, 1]} : vector<32x256xbf16> to vector<32x196xbf16>
    %207 = tpu.concatenate %205, %206 in 1 : vector<32x60xbf16>, vector<32x196xbf16> -> vector<32x256xbf16>
    %c1_95 = arith.constant 1 : index
    %c2_96 = arith.constant 2 : index
    %c0_97 = arith.constant 0 : index
    %c0_98 = arith.constant 0 : index
    %208 = vector.load %arg2[%c1_95, %c2_96, %c0_97, %c0_98] : memref<2x9x16x32xbf16, #tpu.memory_space<vmem>>, vector<1x1x16x32xbf16>
    %209 = vector.shape_cast %208 : vector<1x1x16x32xbf16> to vector<16x32xbf16>
    %cst_99 = arith.constant dense<0.000000e+00> : vector<16x256xf32>
    %210 = tpu.matmul %209, %207, %cst_99 {dimension_numbers = #tpu.dot_dimension_numbers<[1], [0], [0], [1], [0, 0, 1, 1], [], []>} : vector<16x32xbf16>, vector<32x256xbf16>, vector<16x256xf32> -> vector<16x256xf32>
    %211 = arith.andi %162, %171 : vector<1x256xi1>
    %cst_100 = arith.constant 0.000000e+00 : f32
    %212 = vector.shape_cast %211 : vector<1x256xi1> to vector<1x256xi1>
    %213 = vector.broadcast %212 : vector<1x256xi1> to vector<16x256xi1>
    %214 = vector.broadcast %cst_100 : f32 to vector<16x256xf32>
    %215 = arith.select %213, %210, %214 : vector<16x256xi1>, vector<16x256xf32>
    %216 = arith.addf %204, %215 : vector<16x256xf32>
    %217 = vector.extract_strided_slice %1 {offsets = [0, 252], sizes = [32, 4], strides = [1, 1]} : vector<32x256xbf16> to vector<32x4xbf16>
    %218 = vector.extract_strided_slice %1 {offsets = [0, 0], sizes = [32, 252], strides = [1, 1]} : vector<32x256xbf16> to vector<32x252xbf16>
    %219 = tpu.concatenate %217, %218 in 1 : vector<32x4xbf16>, vector<32x252xbf16> -> vector<32x256xbf16>
    %c1_101 = arith.constant 1 : index
    %c3_102 = arith.constant 3 : index
    %c0_103 = arith.constant 0 : index
    %c0_104 = arith.constant 0 : index
    %220 = vector.load %arg2[%c1_101, %c3_102, %c0_103, %c0_104] : memref<2x9x16x32xbf16, #tpu.memory_space<vmem>>, vector<1x1x16x32xbf16>
    %221 = vector.shape_cast %220 : vector<1x1x16x32xbf16> to vector<16x32xbf16>
    %cst_105 = arith.constant dense<0.000000e+00> : vector<16x256xf32>
    %222 = tpu.matmul %221, %219, %cst_105 {dimension_numbers = #tpu.dot_dimension_numbers<[1], [0], [0], [1], [0, 0, 1, 1], [], []>} : vector<16x32xbf16>, vector<32x256xbf16>, vector<16x256xf32> -> vector<16x256xf32>
    %cst_106 = arith.constant 0.000000e+00 : f32
    %223 = vector.shape_cast %153 : vector<1x256xi1> to vector<1x256xi1>
    %224 = vector.broadcast %223 : vector<1x256xi1> to vector<16x256xi1>
    %225 = vector.broadcast %cst_106 : f32 to vector<16x256xf32>
    %226 = arith.select %224, %222, %225 : vector<16x256xi1>, vector<16x256xf32>
    %227 = arith.addf %216, %226 : vector<16x256xf32>
    %c1_107 = arith.constant 1 : index
    %c4_108 = arith.constant 4 : index
    %c0_109 = arith.constant 0 : index
    %c0_110 = arith.constant 0 : index
    %228 = vector.load %arg2[%c1_107, %c4_108, %c0_109, %c0_110] : memref<2x9x16x32xbf16, #tpu.memory_space<vmem>>, vector<1x1x16x32xbf16>
    %229 = vector.shape_cast %228 : vector<1x1x16x32xbf16> to vector<16x32xbf16>
    %cst_111 = arith.constant dense<0.000000e+00> : vector<16x256xf32>
    %230 = tpu.matmul %229, %1, %cst_111 {dimension_numbers = #tpu.dot_dimension_numbers<[1], [0], [0], [1], [0, 0, 1, 1], [], []>} : vector<16x32xbf16>, vector<32x256xbf16>, vector<16x256xf32> -> vector<16x256xf32>
    %231 = arith.addf %227, %230 : vector<16x256xf32>
    %232 = vector.extract_strided_slice %1 {offsets = [0, 4], sizes = [32, 252], strides = [1, 1]} : vector<32x256xbf16> to vector<32x252xbf16>
    %233 = vector.extract_strided_slice %1 {offsets = [0, 0], sizes = [32, 4], strides = [1, 1]} : vector<32x256xbf16> to vector<32x4xbf16>
    %234 = tpu.concatenate %232, %233 in 1 : vector<32x252xbf16>, vector<32x4xbf16> -> vector<32x256xbf16>
    %c1_112 = arith.constant 1 : index
    %c5_113 = arith.constant 5 : index
    %c0_114 = arith.constant 0 : index
    %c0_115 = arith.constant 0 : index
    %235 = vector.load %arg2[%c1_112, %c5_113, %c0_114, %c0_115] : memref<2x9x16x32xbf16, #tpu.memory_space<vmem>>, vector<1x1x16x32xbf16>
    %236 = vector.shape_cast %235 : vector<1x1x16x32xbf16> to vector<16x32xbf16>
    %cst_116 = arith.constant dense<0.000000e+00> : vector<16x256xf32>
    %237 = tpu.matmul %236, %234, %cst_116 {dimension_numbers = #tpu.dot_dimension_numbers<[1], [0], [0], [1], [0, 0, 1, 1], [], []>} : vector<16x32xbf16>, vector<32x256xbf16>, vector<16x256xf32> -> vector<16x256xf32>
    %cst_117 = arith.constant 0.000000e+00 : f32
    %238 = vector.shape_cast %162 : vector<1x256xi1> to vector<1x256xi1>
    %239 = vector.broadcast %238 : vector<1x256xi1> to vector<16x256xi1>
    %240 = vector.broadcast %cst_117 : f32 to vector<16x256xf32>
    %241 = arith.select %239, %237, %240 : vector<16x256xi1>, vector<16x256xf32>
    %242 = arith.addf %231, %241 : vector<16x256xf32>
    %243 = vector.extract_strided_slice %1 {offsets = [0, 60], sizes = [32, 196], strides = [1, 1]} : vector<32x256xbf16> to vector<32x196xbf16>
    %244 = vector.extract_strided_slice %1 {offsets = [0, 0], sizes = [32, 60], strides = [1, 1]} : vector<32x256xbf16> to vector<32x60xbf16>
    %245 = tpu.concatenate %243, %244 in 1 : vector<32x196xbf16>, vector<32x60xbf16> -> vector<32x256xbf16>
    %c1_118 = arith.constant 1 : index
    %c6_119 = arith.constant 6 : index
    %c0_120 = arith.constant 0 : index
    %c0_121 = arith.constant 0 : index
    %246 = vector.load %arg2[%c1_118, %c6_119, %c0_120, %c0_121] : memref<2x9x16x32xbf16, #tpu.memory_space<vmem>>, vector<1x1x16x32xbf16>
    %247 = vector.shape_cast %246 : vector<1x1x16x32xbf16> to vector<16x32xbf16>
    %cst_122 = arith.constant dense<0.000000e+00> : vector<16x256xf32>
    %248 = tpu.matmul %247, %245, %cst_122 {dimension_numbers = #tpu.dot_dimension_numbers<[1], [0], [0], [1], [0, 0, 1, 1], [], []>} : vector<16x32xbf16>, vector<32x256xbf16>, vector<16x256xf32> -> vector<16x256xf32>
    %249 = arith.andi %153, %180 : vector<1x256xi1>
    %cst_123 = arith.constant 0.000000e+00 : f32
    %250 = vector.shape_cast %249 : vector<1x256xi1> to vector<1x256xi1>
    %251 = vector.broadcast %250 : vector<1x256xi1> to vector<16x256xi1>
    %252 = vector.broadcast %cst_123 : f32 to vector<16x256xf32>
    %253 = arith.select %251, %248, %252 : vector<16x256xi1>, vector<16x256xf32>
    %254 = arith.addf %242, %253 : vector<16x256xf32>
    %255 = vector.extract_strided_slice %1 {offsets = [0, 64], sizes = [32, 192], strides = [1, 1]} : vector<32x256xbf16> to vector<32x192xbf16>
    %256 = vector.extract_strided_slice %1 {offsets = [0, 0], sizes = [32, 64], strides = [1, 1]} : vector<32x256xbf16> to vector<32x64xbf16>
    %257 = tpu.concatenate %255, %256 in 1 : vector<32x192xbf16>, vector<32x64xbf16> -> vector<32x256xbf16>
    %c1_124 = arith.constant 1 : index
    %c7_125 = arith.constant 7 : index
    %c0_126 = arith.constant 0 : index
    %c0_127 = arith.constant 0 : index
    %258 = vector.load %arg2[%c1_124, %c7_125, %c0_126, %c0_127] : memref<2x9x16x32xbf16, #tpu.memory_space<vmem>>, vector<1x1x16x32xbf16>
    %259 = vector.shape_cast %258 : vector<1x1x16x32xbf16> to vector<16x32xbf16>
    %cst_128 = arith.constant dense<0.000000e+00> : vector<16x256xf32>
    %260 = tpu.matmul %259, %257, %cst_128 {dimension_numbers = #tpu.dot_dimension_numbers<[1], [0], [0], [1], [0, 0, 1, 1], [], []>} : vector<16x32xbf16>, vector<32x256xbf16>, vector<16x256xf32> -> vector<16x256xf32>
    %cst_129 = arith.constant 0.000000e+00 : f32
    %261 = vector.shape_cast %180 : vector<1x256xi1> to vector<1x256xi1>
    %262 = vector.broadcast %261 : vector<1x256xi1> to vector<16x256xi1>
    %263 = vector.broadcast %cst_129 : f32 to vector<16x256xf32>
    %264 = arith.select %262, %260, %263 : vector<16x256xi1>, vector<16x256xf32>
    %265 = arith.addf %254, %264 : vector<16x256xf32>
    %266 = vector.extract_strided_slice %1 {offsets = [0, 68], sizes = [32, 188], strides = [1, 1]} : vector<32x256xbf16> to vector<32x188xbf16>
    %267 = vector.extract_strided_slice %1 {offsets = [0, 0], sizes = [32, 68], strides = [1, 1]} : vector<32x256xbf16> to vector<32x68xbf16>
    %268 = tpu.concatenate %266, %267 in 1 : vector<32x188xbf16>, vector<32x68xbf16> -> vector<32x256xbf16>
    %c1_130 = arith.constant 1 : index
    %c8_131 = arith.constant 8 : index
    %c0_132 = arith.constant 0 : index
    %c0_133 = arith.constant 0 : index
    %269 = vector.load %arg2[%c1_130, %c8_131, %c0_132, %c0_133] : memref<2x9x16x32xbf16, #tpu.memory_space<vmem>>, vector<1x1x16x32xbf16>
    %270 = vector.shape_cast %269 : vector<1x1x16x32xbf16> to vector<16x32xbf16>
    %cst_134 = arith.constant dense<0.000000e+00> : vector<16x256xf32>
    %271 = tpu.matmul %270, %268, %cst_134 {dimension_numbers = #tpu.dot_dimension_numbers<[1], [0], [0], [1], [0, 0, 1, 1], [], []>} : vector<16x32xbf16>, vector<32x256xbf16>, vector<16x256xf32> -> vector<16x256xf32>
    %272 = arith.andi %162, %180 : vector<1x256xi1>
    %cst_135 = arith.constant 0.000000e+00 : f32
    %273 = vector.shape_cast %272 : vector<1x256xi1> to vector<1x256xi1>
    %274 = vector.broadcast %273 : vector<1x256xi1> to vector<16x256xi1>
    %275 = vector.broadcast %cst_135 : f32 to vector<16x256xf32>
    %276 = arith.select %274, %271, %275 : vector<16x256xi1>, vector<16x256xf32>
    %277 = arith.addf %265, %276 : vector<16x256xf32>
    %c0_136 = arith.constant 0 : index
    %c0_137 = arith.constant 0 : index
    %c0_138 = arith.constant 0 : index
    %c0_139 = arith.constant 0 : index
    %278 = vector.load %arg4[%c0_136, %c0_137, %c0_138, %c0_139] : memref<2x2x16x1xf32, #tpu.memory_space<vmem>>, vector<1x1x16x1xf32>
    %279 = vector.shape_cast %278 : vector<1x1x16x1xf32> to vector<16x1xf32>
    %280 = vector.broadcast %279 : vector<16x1xf32> to vector<16x256xf32>
    %281 = arith.addf %144, %280 : vector<16x256xf32>
    %cst_140 = arith.constant 0.000000e+00 : f32
    %282 = vector.broadcast %cst_140 : f32 to vector<16x256xf32>
    %283 = arith.cmpf oge, %281, %282 : vector<16x256xf32>
    %c0_141 = arith.constant 0 : index
    %c1_142 = arith.constant 1 : index
    %c0_143 = arith.constant 0 : index
    %c0_144 = arith.constant 0 : index
    %284 = vector.load %arg4[%c0_141, %c1_142, %c0_143, %c0_144] : memref<2x2x16x1xf32, #tpu.memory_space<vmem>>, vector<1x1x16x1xf32>
    %285 = vector.shape_cast %284 : vector<1x1x16x1xf32> to vector<16x1xf32>
    %286 = vector.broadcast %285 : vector<16x1xf32> to vector<16x256xf32>
    %287 = arith.mulf %286, %281 : vector<16x256xf32>
    %288 = arith.select %283, %281, %287 : vector<16x256xi1>, vector<16x256xf32>
    %c1_145 = arith.constant 1 : index
    %c0_146 = arith.constant 0 : index
    %c0_147 = arith.constant 0 : index
    %c0_148 = arith.constant 0 : index
    %289 = vector.load %arg4[%c1_145, %c0_146, %c0_147, %c0_148] : memref<2x2x16x1xf32, #tpu.memory_space<vmem>>, vector<1x1x16x1xf32>
    %290 = vector.shape_cast %289 : vector<1x1x16x1xf32> to vector<16x1xf32>
    %291 = vector.broadcast %290 : vector<16x1xf32> to vector<16x256xf32>
    %292 = arith.addf %277, %291 : vector<16x256xf32>
    %cst_149 = arith.constant 0.000000e+00 : f32
    %293 = vector.broadcast %cst_149 : f32 to vector<16x256xf32>
    %294 = arith.cmpf oge, %292, %293 : vector<16x256xf32>
    %c1_150 = arith.constant 1 : index
    %c1_151 = arith.constant 1 : index
    %c0_152 = arith.constant 0 : index
    %c0_153 = arith.constant 0 : index
    %295 = vector.load %arg4[%c1_150, %c1_151, %c0_152, %c0_153] : memref<2x2x16x1xf32, #tpu.memory_space<vmem>>, vector<1x1x16x1xf32>
    %296 = vector.shape_cast %295 : vector<1x1x16x1xf32> to vector<16x1xf32>
    %297 = vector.broadcast %296 : vector<16x1xf32> to vector<16x256xf32>
    %298 = arith.mulf %297, %292 : vector<16x256xf32>
    %299 = arith.select %294, %292, %298 : vector<16x256xi1>, vector<16x256xf32>
    %c0_154 = arith.constant 0 : index
    %c0_155 = arith.constant 0 : index
    %c0_156 = arith.constant 0 : index
    %300 = vector.load %arg3[%c0_154, %c0_155, %c0_156] : memref<2x32x16xbf16, #tpu.memory_space<vmem>>, vector<1x32x16xbf16>
    %301 = vector.shape_cast %300 : vector<1x32x16xbf16> to vector<32x16xbf16>
    %302 = arith.truncf %288 : vector<16x256xf32> to vector<16x256xbf16>
    %cst_157 = arith.constant dense<0.000000e+00> : vector<32x256xf32>
    %303 = tpu.matmul %301, %302, %cst_157 {dimension_numbers = #tpu.dot_dimension_numbers<[1], [0], [0], [1], [0, 0, 1, 1], [], []>} : vector<32x16xbf16>, vector<16x256xbf16>, vector<32x256xf32> -> vector<32x256xf32>
    %c1_158 = arith.constant 1 : index
    %c0_159 = arith.constant 0 : index
    %c0_160 = arith.constant 0 : index
    %304 = vector.load %arg3[%c1_158, %c0_159, %c0_160] : memref<2x32x16xbf16, #tpu.memory_space<vmem>>, vector<1x32x16xbf16>
    %305 = vector.shape_cast %304 : vector<1x32x16xbf16> to vector<32x16xbf16>
    %306 = arith.truncf %299 : vector<16x256xf32> to vector<16x256xbf16>
    %cst_161 = arith.constant dense<0.000000e+00> : vector<32x256xf32>
    %307 = tpu.matmul %305, %306, %cst_161 {dimension_numbers = #tpu.dot_dimension_numbers<[1], [0], [0], [1], [0, 0, 1, 1], [], []>} : vector<32x16xbf16>, vector<16x256xbf16>, vector<32x256xf32> -> vector<32x256xf32>
    %308 = arith.addf %303, %307 : vector<32x256xf32>
    %309 = arith.negf %308 : vector<32x256xf32>
    %310 = math.exp %309 : vector<32x256xf32>
    %cst_162 = arith.constant 1.000000e+00 : f32
    %311 = vector.broadcast %cst_162 : f32 to vector<32x256xf32>
    %312 = arith.addf %311, %310 : vector<32x256xf32>
    %313 = arith.divf %311, %312 : vector<32x256xf32>
    %c0_163 = arith.constant 0 : index
    %c0_164 = arith.constant 0 : index
    %c0_165 = arith.constant 0 : index
    %314 = vector.load %arg5[%c0_163, %c0_164, %c0_165] : memref<1x32x256xf32, #tpu.memory_space<vmem>>, vector<1x32x256xf32>
    %315 = vector.shape_cast %314 : vector<1x32x256xf32> to vector<32x256xf32>
    %316 = vector.shape_cast %313 : vector<32x256xf32> to vector<1x32x256xf32>
    tpu.vector_store %arg5[%c0_163, %c0_164, %c0_165], %316 {strides = array<i32>} : memref<1x32x256xf32, #tpu.memory_space<vmem>>, vector<1x32x256xf32>,
    return
  }
  func.func @transform_0(%arg0: i32) -> (i32, i32, i32) {
    %c0_i32 = arith.constant 0 : i32
    %c0_i32_0 = arith.constant 0 : i32
    %c0_i32_1 = arith.constant 0 : i32
    return %arg0, %c0_i32, %c0_i32_0 : i32, i32, i32
  }
  func.func @transform_1(%arg0: i32) -> (i32, i32, i32, i32) {
    %c0_i32 = arith.constant 0 : i32
    %c0_i32_0 = arith.constant 0 : i32
    %c0_i32_1 = arith.constant 0 : i32
    %c0_i32_2 = arith.constant 0 : i32
    %c0_i32_3 = arith.constant 0 : i32
    return %c0_i32, %c0_i32_0, %c0_i32_1, %c0_i32_2 : i32, i32, i32, i32
  }
  func.func @transform_2(%arg0: i32) -> (i32, i32, i32) {
    %c0_i32 = arith.constant 0 : i32
    %c0_i32_0 = arith.constant 0 : i32
    %c0_i32_1 = arith.constant 0 : i32
    %c0_i32_2 = arith.constant 0 : i32
    return %c0_i32, %c0_i32_0, %c0_i32_1 : i32, i32, i32
  }
  func.func @transform_3(%arg0: i32) -> (i32, i32, i32, i32) {
    %c0_i32 = arith.constant 0 : i32
    %c0_i32_0 = arith.constant 0 : i32
    %c0_i32_1 = arith.constant 0 : i32
    %c0_i32_2 = arith.constant 0 : i32
    %c0_i32_3 = arith.constant 0 : i32
    return %c0_i32, %c0_i32_0, %c0_i32_1, %c0_i32_2 : i32, i32, i32, i32
  }
  func.func @transform_4(%arg0: i32) -> (i32, i32, i32) {
    %c0_i32 = arith.constant 0 : i32
    %c0_i32_0 = arith.constant 0 : i32
    %c0_i32_1 = arith.constant 0 : i32
    return %arg0, %c0_i32, %c0_i32_0 : i32, i32, i32
  }
}

</mosaic_0001>

<llo_original>
// kernel: tpu_custom_call.1
$region0: #{tpu_custom_call.1}
  #allocation0 [shape = 'u32[]', space=smem, size = 0x4, offset = 0x4, fixed_abs, tag = 'smem constant byte address 0x4 - core index']
  #allocation1 [shape = 'u32[144,128]{1,0:T(1,128)}', space=vmem, size = 0x12000, scoped, tag = 'internal scratch']
  %s0 = inlined_call_operand.vmem [shape: bf16[2,32,256], index: 0, kind: input, shape index: {}]
  %s1 = inlined_call_operand.hbm [shape: bf16[2,9,16,32], index: 1, kind: input, shape index: {}]
  %s2 = inlined_call_operand.vmem [shape: bf16[2,32,16], index: 2, kind: input, shape index: {}]
  %s3 = inlined_call_operand.vmem [shape: f32[2,2,16,1], index: 3, kind: input, shape index: {}]
  %s4 = inlined_call_operand.hbm [shape: f32[2,32,256], index: 4, kind: output, shape index: {}]
  %s5 = sld [smem:[#allocation0]]
  $region53: #{tpu_custom_call.1} parent=0
    _
  %s7 = ssub.s32 1, %s5
  %s8 = scalar_select 0, %s7, %s5
  $region1: #{tpu_custom_call.1} parent=0
    #allocation2 [shape = 'u8[73728]{0}', space=vmem, size = 0x12000, scoped, tag = 'input window, operand 1, single buffered']
    #allocation3 [shape = 's32[2]{0}', space=sflag, size = 0x8, scoped, tag = 'scoped memory for tpu_custom_call.1']
    #allocation4 [shape = 's32[2]{0}', space=sflag, size = 0x8, scoped, tag = 'scoped memory for tpu_custom_call.1']
    #allocation5 [shape = 'u8[65536]{0}', space=vmem, size = 0x10000, scoped, tag = 'output window, operand 0']
    %9 = vsyncpa [#allocation3], 0
    %10 = vsyncpa [#allocation4], 0
    %s11 = scalar_lea.sflag [#allocation4], 1
    %12 = vsyncpa %s11, 0
    loop: start=0, step=1, limit=4
    $region2: #{tpu_custom_call.1} parent=1 // loop_pre_header
      _
    $region3: #{tpu_custom_call.1} parent=1 // loop_header
      %s14 = sphi 0, %s18
      %p15 = scmp.ge.s32.totalorder %s14, 4
      %s24 = sphi 0, %s26
      %s27 = sphi 0, %s24
      %s28 = sphi 0, %s27
      %s44 = sphi 0, %s28
      %s48 = sphi 0, %s48
      %s50 = sphi 0, %s48
      %s51 = sphi 0, %s50
      %s65 = sphi 0, %s51
      %s69 = sphi 0, %s69
      %s71 = sphi 0, %s69
      %s72 = sphi 0, %s71
      %s86 = sphi 0, %s72
      %s90 = sphi 0, %s90
      %s92 = sphi 0, %s90
      %s93 = sphi 0, %s92
      %s107 = sphi 0, %s93
      %s113 = sphi 0, %s115
      %s116 = sphi 0, %s113
      %s117 = sphi 0, %s116
      %s133 = sphi 0, %s117
    $region4: #{tpu_custom_call.1} parent=1 // loop_header_branch
      %17 = sbr.rel (%p15) target = $region8
    $region5: #{tpu_custom_call.1} parent=1 // loop_body
      %s19 = ssub.s32 %s14, 1
      %s20 = ssub.s32 %s14, 2
      %s21 = sadd.s32 %s14, 1
      %s22 = ssub.s32 %s14, %s21
      %p23 = scmp.eq.s32.totalorder %s22, 0
      %s25 = sadd.s32 %s24, 1
      %s26 = scalar_select %p23, %s24, %s25
      %p29 = pneg %p23
      %p30 = scmp.eq.s32.totalorder %s14, 1
      %p31 = por %p29, %p30
      %p32 = scmp.ne.s32.totalorder %s24, %s27
      %p33 = scmp.eq.s32.totalorder %s14, 0
      %p34 = por %p32, %p33
      %p35 = scmp.ne.s32.totalorder %s24, %s27
      %p36 = scmp.eq.s32.totalorder %s19, 1
      %p37 = por %p35, %p36
      %p38 = scmp.ne.s32.totalorder %s27, %s28
      %p39 = scmp.eq.s32.totalorder %s19, 0
      %p40 = por %p38, %p39
      %p41 = scmp.ne.s32.totalorder %s27, %s28
      %p42 = scmp.eq.s32.totalorder %s20, 1
      %p43 = por %p41, %p42
      %p45 = scmp.ne.s32.totalorder %s28, %s44
      %p46 = scmp.eq.s32.totalorder %s20, 0
      %p47 = por %p45, %p46
      %s49 = sadd.s32 %s48, 1
      %p52 = scmp.eq.s32.totalorder %s14, 1
      %p53 = scmp.ne.s32.totalorder %s48, %s50
      %p54 = scmp.eq.s32.totalorder %s14, 0
      %p55 = por %p53, %p54
      %p56 = scmp.ne.s32.totalorder %s48, %s50
      %p57 = scmp.eq.s32.totalorder %s19, 1
      %p58 = por %p56, %p57
      %p59 = scmp.ne.s32.totalorder %s50, %s51
      %p60 = scmp.eq.s32.totalorder %s19, 0
      %p61 = por %p59, %p60
      %p62 = scmp.ne.s32.totalorder %s50, %s51
      %p63 = scmp.eq.s32.totalorder %s20, 1
      %p64 = por %p62, %p63
      %p66 = scmp.ne.s32.totalorder %s51, %s65
      %p67 = scmp.eq.s32.totalorder %s20, 0
      %p68 = por %p66, %p67
      %s70 = sadd.s32 %s69, 1
      %p73 = scmp.eq.s32.totalorder %s14, 1
      %p74 = scmp.ne.s32.totalorder %s69, %s71
      %p75 = scmp.eq.s32.totalorder %s14, 0
      %p76 = por %p74, %p75
      %p77 = scmp.ne.s32.totalorder %s69, %s71
      %p78 = scmp.eq.s32.totalorder %s19, 1
      %p79 = por %p77, %p78
      %p80 = scmp.ne.s32.totalorder %s71, %s72
      %p81 = scmp.eq.s32.totalorder %s19, 0
      %p82 = por %p80, %p81
      %p83 = scmp.ne.s32.totalorder %s71, %s72
      %p84 = scmp.eq.s32.totalorder %s20, 1
      %p85 = por %p83, %p84
      %p87 = scmp.ne.s32.totalorder %s72, %s86
      %p88 = scmp.eq.s32.totalorder %s20, 0
      %p89 = por %p87, %p88
      %s91 = sadd.s32 %s90, 1
      %p94 = scmp.eq.s32.totalorder %s14, 1
      %p95 = scmp.ne.s32.totalorder %s90, %s92
      %p96 = scmp.eq.s32.totalorder %s14, 0
      %p97 = por %p95, %p96
      %p98 = scmp.ne.s32.totalorder %s90, %s92
      %p99 = scmp.eq.s32.totalorder %s19, 1
      %p100 = por %p98, %p99
      %p101 = scmp.ne.s32.totalorder %s92, %s93
      %p102 = scmp.eq.s32.totalorder %s19, 0
      %p103 = por %p101, %p102
      %p104 = scmp.ne.s32.totalorder %s92, %s93
      %p105 = scmp.eq.s32.totalorder %s20, 1
      %p106 = por %p104, %p105
      %p108 = scmp.ne.s32.totalorder %s93, %s107
      %p109 = scmp.eq.s32.totalorder %s20, 0
      %p110 = por %p108, %p109
      %s111 = ssub.s32 %s14, %s21
      %p112 = scmp.eq.s32.totalorder %s111, 0
      %s114 = sadd.s32 %s113, 1
      %s115 = scalar_select %p112, %s113, %s114
      %p118 = pneg %p112
      %p119 = scmp.eq.s32.totalorder %s14, 1
      %p120 = por %p118, %p119
      %p121 = scmp.ne.s32.totalorder %s113, %s116
      %p122 = scmp.eq.s32.totalorder %s14, 0
      %p123 = por %p121, %p122
      %p124 = scmp.ne.s32.totalorder %s113, %s116
      %p125 = scmp.eq.s32.totalorder %s19, 1
      %p126 = por %p124, %p125
      %p127 = scmp.ne.s32.totalorder %s116, %s117
      %p128 = scmp.eq.s32.totalorder %s19, 0
      %p129 = por %p127, %p128
      %p130 = scmp.ne.s32.totalorder %s116, %s117
      %p131 = scmp.eq.s32.totalorder %s20, 1
      %p132 = por %p130, %p131
      %p134 = scmp.ne.s32.totalorder %s117, %s133
      %p135 = scmp.eq.s32.totalorder %s20, 0
      %p136 = por %p134, %p135
      %p137 = scmp.le.s32.totalorder 1, %s14
      %p138 = scmp.lt.s32.totalorder %s14, 3
      %p139 = pnand %p137, %p138
      %p140 = pneg %p139
      // Predicated region
      $region9: #{tpu_custom_call.1} parent=5 // pred_check
        _
      $region10: #{tpu_custom_call.1} parent=5 // pred_check_branch
        %142 = sbr.rel (%p139) target = $region12
      $region11: #{tpu_custom_call.1} parent=5 // pred_region
        %s143 = ssub.s32 %s14, 1
        // Predicated region
        $region13: #{tpu_custom_call.1} parent=11 // pred_check
          %p144 = pneg %p61
        $region14: #{tpu_custom_call.1} parent=11 // pred_check_branch
          %146 = sbr.rel (%p144) target = $region16
        $region15: #{tpu_custom_call.1} parent=11 // pred_region
          %s148 = ssub.s32 2304, 2304
          %149 = vsyncadd [#allocation3], %s148
          %s150 = sshll.u32 [#allocation2], 4
          %s151 = int_to_ptr.vmem [resolvable:$true] %s150
          %156 = dma.hbm_to_vmem [thread:$0]  %s1, 2304, %s151, [#allocation3], 64, 64, 4
        $region16: #{tpu_custom_call.1} parent=11 // pred_fallthru
          _
        // Predicated region
        $region17: #{tpu_custom_call.1} parent=11 // pred_check
          %p157 = pneg %p82
        $region18: #{tpu_custom_call.1} parent=11 // pred_check_branch
          %159 = sbr.rel (%p157) target = $region20
        $region19: #{tpu_custom_call.1} parent=11 // pred_region
          _
        $region20: #{tpu_custom_call.1} parent=11 // pred_fallthru
          _
        // Predicated region
        $region21: #{tpu_custom_call.1} parent=11 // pred_check
          %p160 = pneg %p103
        $region22: #{tpu_custom_call.1} parent=11 // pred_check_branch
          %162 = sbr.rel (%p160) target = $region24
        $region23: #{tpu_custom_call.1} parent=11 // pred_region
          _
        $region24: #{tpu_custom_call.1} parent=11 // pred_fallthru
          _
      $region12: #{tpu_custom_call.1} parent=5 // pred_fallthru
        _
      %p163 = scmp.lt.s32.totalorder %s14, 2
      // Predicated region
      $region25: #{tpu_custom_call.1} parent=5 // pred_check
        %p164 = pneg %p163
      $region26: #{tpu_custom_call.1} parent=5 // pred_check_branch
        %166 = sbr.rel (%p164) target = $region28
      $region27: #{tpu_custom_call.1} parent=5 // pred_region
        // Predicated region
        $region29: #{tpu_custom_call.1} parent=27 // pred_check
          %p167 = pneg %p34
        $region30: #{tpu_custom_call.1} parent=27 // pred_check_branch
          %169 = sbr.rel (%p167) target = $region32
        $region31: #{tpu_custom_call.1} parent=27 // pred_region
          %p170 = scmp.lt.s32.totalorder %s14, 1
          %s171 = scalar_select %p170, %s14, 1
          %s172 = smul.addr %s171, 8
          %s173 = smul.addr %s172, 4
          %s174 = scalar_lea.vmem %s0, %s173
        $region32: #{tpu_custom_call.1} parent=27 // pred_fallthru
          _
      $region28: #{tpu_custom_call.1} parent=5 // pred_fallthru
        _
      %p175 = scmp.le.s32.totalorder 1, %s14
      %p176 = scmp.lt.s32.totalorder %s14, 3
      %p177 = pnand %p175, %p176
      %p178 = pneg %p177
      // Predicated region
      $region33: #{tpu_custom_call.1} parent=5 // pred_check
        _
      $region34: #{tpu_custom_call.1} parent=5 // pred_check_branch
        %180 = sbr.rel (%p177) target = $region36
      $region35: #{tpu_custom_call.1} parent=5 // pred_region
        %s181 = ssub.s32 %s14, 1
        // Predicated region
        $region37: #{tpu_custom_call.1} parent=35 // pred_check
          %p182 = pneg %p61
        $region38: #{tpu_custom_call.1} parent=35 // pred_check_branch
          %184 = sbr.rel (%p182) target = $region40
        $region39: #{tpu_custom_call.1} parent=35 // pred_region
          %185 = dma.done [#allocation3], 2304
        $region40: #{tpu_custom_call.1} parent=35 // pred_fallthru
          _
        %p186 = scmp.lt.s32.totalorder %s19, 1
        %s187 = scalar_select %p186, %s19, 1
        %s188 = smul.addr %s187, 8
        %s189 = smul.addr %s188, 4
        %s190 = scalar_lea.vmem %s0, %s189
        %p191 = pneg %p40
        %p192 = pneg %p37
        %p193 = pneg %p61
        %p194 = pneg %p58
        %p195 = pneg %p82
        %p196 = pneg %p79
        %p197 = pneg %p103
        %p198 = pneg %p100
        %p199 = pneg %p129
        %p200 = pneg %p126
        %s201 = sand.u32 %s116, 1
        %s202 = scalar_lea.sflag [#allocation4], %s201
        %s203 = sand.u32 %s116, 1
        %s204 = smul.addr %s203, 64
        %s205 = scalar_lea.vmem [#allocation5], %s204
        %p206 = scmp.lt.s32.totalorder %s19, 1
        %s207 = scalar_select %p206, %s19, 1
        %s208 = smul.addr %s207, 8
        %s209 = smul.addr %s208, 4
        %s210 = scalar_lea.vmem %s0, %s209
        %v212 = vld [vmem:[%s210] sm:$0xff]
        %v213 = vld [vmem:[%s210 + $0x8] sm:$0xff]
        %v214 = vld [vmem:[%s210 + $0x10] sm:$0xff]
        %v215 = vld [vmem:[%s210 + $0x18] sm:$0xff]
        %v216 = vlaneseq
        %v217 = vand.u32 %v216, 127
        %v218 = vadd.s32 %v217, 128
        %v219 = vcvt.s32.f32 %v217
        %v220 = vcvt.s32.f32 %v218
        %v221 = vadd.f32 %v219, 0.5
        %v222 = vadd.f32 %v220, 0.5
        %v223 = vrcp.pop 16.0
        %v224 = vmul.f32 %v221, %v223
        %v225 = vmul.f32 %v222, %v223
        %v226 = vfloor.f32 %v224
        %v227 = vfloor.f32 %v225
        %v228 = vmul.f32 %v226, 16.0
        %v229 = vmul.f32 %v227, 16.0
        %v230 = vsub.f32 %v219, %v228
        %v231 = vsub.f32 %v220, %v229
        %v232 = vadd.f32 %v230, -2.0
        %v233 = vadd.f32 %v231, -2.0
        %vm234 = vcmp.ge.f32.partialorder %v232, 0.0
        %vm235 = vcmp.ge.f32.partialorder %v233, 0.0
        %vm236 = vcmp.le.f32.partialorder %v232, 15.0
        %vm237 = vcmp.le.f32.partialorder %v233, 15.0
        %vm238 = vmand %vm234, %vm236
        %vm239 = vmand %vm235, %vm237
        %v240 = vadd.f32 %v230, 2.0
        %v241 = vadd.f32 %v231, 2.0
        %vm242 = vcmp.ge.f32.partialorder %v240, 0.0
        %vm243 = vcmp.ge.f32.partialorder %v241, 0.0
        %vm244 = vcmp.le.f32.partialorder %v240, 15.0
        %vm245 = vcmp.le.f32.partialorder %v241, 15.0
        %vm246 = vmand %vm242, %vm244
        %vm247 = vmand %vm243, %vm245
        %v248 = vadd.f32 %v226, -2.0
        %v249 = vadd.f32 %v227, -2.0
        %vm250 = vcmp.ge.f32.partialorder %v248, 0.0
        %vm251 = vcmp.ge.f32.partialorder %v249, 0.0
        %vm252 = vcmp.le.f32.partialorder %v248, 15.0
        %vm253 = vcmp.le.f32.partialorder %v249, 15.0
        %vm254 = vmand %vm250, %vm252
        %vm255 = vmand %vm251, %vm253
        %v256 = vadd.f32 %v226, 2.0
        %v257 = vadd.f32 %v227, 2.0
        %vm258 = vcmp.ge.f32.partialorder %v256, 0.0
        %vm259 = vcmp.ge.f32.partialorder %v257, 0.0
        %vm260 = vcmp.le.f32.partialorder %v256, 15.0
        %vm261 = vcmp.le.f32.partialorder %v257, 15.0
        %vm262 = vmand %vm258, %vm260
        %vm263 = vmand %vm259, %vm261
        %v268 = vunpack.c.h.b16 %v212
        %v269 = vunpack.c.h.b16 %v213
        %v270 = vunpack.c.h.b16 %v214
        %v271 = vunpack.c.h.b16 %v215
        %v272 = vpack.c.b16 %v269, %v268
        %v273 = vpack.c.b16 %v271, %v270
        %274 = vrot.lane.b32.xlu0 %v272, 34
        %v275 = vpop.permute.xlu0 %274
        %276 = vrot.lane.b32.xlu0 %v273, 34
        %v277 = vpop.permute.xlu0 %276
        %v278 = vunpack.c.l.b16 %v212
        %v279 = vunpack.c.l.b16 %v213
        %v280 = vunpack.c.l.b16 %v214
        %v281 = vunpack.c.l.b16 %v215
        %v282 = vpack.c.b16 %v279, %v278
        %v283 = vpack.c.b16 %v281, %v280
        %284 = vrot.lane.b32.xlu0 %v282, 34
        %v285 = vpop.permute.xlu0 %284
        %286 = vrot.lane.b32.xlu0 %v283, 34
        %v287 = vpop.permute.xlu0 %286
        %vm288 = vcmask 277504
        %v289 = vsel %vm288, %v285, %v275
        %v290 = vsel %vm288, %v287, %v277
        %vm293 = vcmask 277504
        %v296 = vsel %vm293, %v275, %v285
        %v300 = vsel %vm293, %v277, %v287
        %v302 = vld [vmem:[#allocation2] sm:$0xf]
        %v303 = vld [vmem:[#allocation2 + $0x4] sm:$0xf]
        %v306 = vunpack.c.l.b16 %v302
        %v307 = vunpack.c.l.b16 %v303
        %v308 = vpack.c.b16 %v307, %v306
        %vm309 = vcmask 261120
        %v311 = vsel %vm309, %v308, 0
        %313 = vmatprep.subr.bf16.mxu0 %v289
        %314 = vmatpush1.bf16.msra.mxu0 %v296
        %315 = vmatprep.subr.bf16.mxu0 %v290
        %316 = vmatpush1.bf16.msra.mxu0 %v300
        %317 = vmatprep.subr.bf16.mxu0 0
        %318 = vmatpush1.bf16.msra.mxu0 0
        %319 = vmatprep.subr.bf16.mxu0 0
        %320 = vmatpush1.bf16.msra.mxu0 0
        %321 = vmatprep.subr.bf16.mxu0 0
        %322 = vmatpush1.bf16.msra.mxu0 0
        %323 = vmatprep.subr.bf16.mxu0 0
        %324 = vmatpush1.bf16.msra.mxu0 0
        %325 = vmatprep.subr.bf16.mxu0 0
        %326 = vmatpush1.bf16.msra.mxu0 0
        %327 = vmatprep.subr.bf16.mxu0 0
        %328 = vmatpush1.bf16.msra.mxu0 0
        %329 = vmatprep.subr.bf16.mxu0 0
        %330 = vmatpush1.bf16.msra.mxu0 0
        %331 = vmatprep.subr.bf16.mxu0 0
        %332 = vmatpush1.bf16.msra.mxu0 0
        %333 = vmatprep.subr.bf16.mxu0 0
        %334 = vmatpush1.bf16.msra.mxu0 0
        %335 = vmatprep.subr.bf16.mxu0 0
        %336 = vmatpush1.bf16.msra.mxu0 0
        %337 = vmatprep.subr.bf16.mxu0 0
        %338 = vmatpush1.bf16.msra.mxu0 0
        %339 = vmatprep.subr.bf16.mxu0 0
        %340 = vmatpush1.bf16.msra.mxu0 0
        %341 = vmatprep.subr.bf16.mxu0 0
        %342 = vmatpush1.bf16.msra.mxu0 0
        %343 = vmatprep.subr.bf16.mxu0 0
        %344 = vmatpush1.bf16.msra.mxu0 0
        %345 = vmatprep.mubr.bf16.mxu0 0
        %346 = vmatmul.mubr.bf16.gmra.mrb[0].mxu0 %v311
        %v347 = vpop.f32.mrb[0].mxu0
        %v348 = vadd.f32 0.0, %v347
        %v349 = vpop.f32.mrb[0].mxu0
        %v350 = vadd.f32 0.0, %v349
        %v351 = vpop.f32.mrb[0].mxu0
        %v352 = vadd.f32 0.0, %v351
        %v353 = vpop.f32.mrb[0].mxu0
        %v354 = vadd.f32 0.0, %v353
        %355 = vdwg.mxu0
        %vm356 = vmand %vm238, %vm254
        %vm357 = vmand %vm239, %vm255
        %v358 = vsel %vm356, 1, 0
        %v359 = vsel %vm357, 1, 0
        %vm360 = vcmp.eq.s32.totalorder %v358, 1
        %vm361 = vcmp.eq.s32.totalorder %v359, 1
        %v362 = vsel %vm360, %v348, 0.0
        %v363 = vsel %vm361, %v350, 0.0
        %v364 = vsel %vm360, %v352, 0.0
        %v365 = vsel %vm361, %v354, 0.0
        %v366 = vadd.f32 %v362, 0.0
        %v367 = vadd.f32 %v363, 0.0
        %v368 = vadd.f32 %v364, 0.0
        %v369 = vadd.f32 %v365, 0.0
        %370 = vrot.lane.b32.xlu0 %v272, 32
        %v371 = vpop.permute.xlu0 %370
        %372 = vrot.lane.b32.xlu0 %v273, 32
        %v373 = vpop.permute.xlu0 %372
        %374 = vrot.lane.b32.xlu0 %v282, 32
        %v375 = vpop.permute.xlu0 %374
        %376 = vrot.lane.b32.xlu0 %v283, 32
        %v377 = vpop.permute.xlu0 %376
        %vm378 = vcmask 261120
        %v379 = vsel %vm378, %v375, %v371
        %v380 = vsel %vm378, %v377, %v373
        %v385 = vsel %vm309, %v371, %v375
        %v389 = vsel %vm309, %v373, %v377
        %s391 = scalar_lea.vmem [#allocation2], 8
        %v392 = vld [vmem:[%s391] sm:$0xf]
        %v393 = vld [vmem:[%s391 + $0x4] sm:$0xf]
        %v396 = vunpack.c.l.b16 %v392
        %v397 = vunpack.c.l.b16 %v393
        %v398 = vpack.c.b16 %v397, %v396
        %v400 = vsel %vm309, %v398, 0
        %402 = vmatprep.subr.bf16.mxu0 %v379
        %403 = vmatpush1.bf16.msra.mxu0 %v385
        %404 = vmatprep.subr.bf16.mxu0 %v380
        %405 = vmatpush1.bf16.msra.mxu0 %v389
        %406 = vmatprep.subr.bf16.mxu0 0
        %407 = vmatpush1.bf16.msra.mxu0 0
        %408 = vmatprep.subr.bf16.mxu0 0
        %409 = vmatpush1.bf16.msra.mxu0 0
        %410 = vmatprep.subr.bf16.mxu0 0
        %411 = vmatpush1.bf16.msra.mxu0 0
        %412 = vmatprep.subr.bf16.mxu0 0
        %413 = vmatpush1.bf16.msra.mxu0 0
        %414 = vmatprep.subr.bf16.mxu0 0
        %415 = vmatpush1.bf16.msra.mxu0 0
        %416 = vmatprep.subr.bf16.mxu0 0
        %417 = vmatpush1.bf16.msra.mxu0 0
        %418 = vmatprep.subr.bf16.mxu0 0
        %419 = vmatpush1.bf16.msra.mxu0 0
        %420 = vmatprep.subr.bf16.mxu0 0
        %421 = vmatpush1.bf16.msra.mxu0 0
        %422 = vmatprep.subr.bf16.mxu0 0
        %423 = vmatpush1.bf16.msra.mxu0 0
        %424 = vmatprep.subr.bf16.mxu0 0
        %425 = vmatpush1.bf16.msra.mxu0 0
        %426 = vmatprep.subr.bf16.mxu0 0
        %427 = vmatpush1.bf16.msra.mxu0 0
        %428 = vmatprep.subr.bf16.mxu0 0
        %429 = vmatpush1.bf16.msra.mxu0 0
        %430 = vmatprep.subr.bf16.mxu0 0
        %431 = vmatpush1.bf16.msra.mxu0 0
        %432 = vmatprep.subr.bf16.mxu0 0
        %433 = vmatpush1.bf16.msra.mxu0 0
        %434 = vmatprep.mubr.bf16.mxu0 0
        %435 = vmatmul.mubr.bf16.gmra.mrb[0].mxu0 %v400
        %v436 = vpop.f32.mrb[0].mxu0
        %v437 = vadd.f32 0.0, %v436
        %v438 = vpop.f32.mrb[0].mxu0
        %v439 = vadd.f32 0.0, %v438
        %v440 = vpop.f32.mrb[0].mxu0
        %v441 = vadd.f32 0.0, %v440
        %v442 = vpop.f32.mrb[0].mxu0
        %v443 = vadd.f32 0.0, %v442
        %444 = vdwg.mxu0
        %v445 = vsel %vm254, 1, 0
        %v446 = vsel %vm255, 1, 0
        %vm447 = vcmp.eq.s32.totalorder %v445, 1
        %vm448 = vcmp.eq.s32.totalorder %v446, 1
        %v449 = vsel %vm447, %v437, 0.0
        %v450 = vsel %vm448, %v439, 0.0
        %v451 = vsel %vm447, %v441, 0.0
        %v452 = vsel %vm448, %v443, 0.0
        %v453 = vadd.f32 %v366, %v449
        %v454 = vadd.f32 %v367, %v450
        %v455 = vadd.f32 %v368, %v451
        %v456 = vadd.f32 %v369, %v452
        %457 = vrot.lane.b32.xlu0 %v272, 30
        %v458 = vpop.permute.xlu0 %457
        %459 = vrot.lane.b32.xlu0 %v273, 30
        %v460 = vpop.permute.xlu0 %459
        %461 = vrot.lane.b32.xlu0 %v282, 30
        %v462 = vpop.permute.xlu0 %461
        %463 = vrot.lane.b32.xlu0 %v283, 30
        %v464 = vpop.permute.xlu0 %463
        %vm465 = vcmask 244736
        %v466 = vsel %vm465, %v462, %v458
        %v467 = vsel %vm465, %v464, %v460
        %vm470 = vcmask 244736
        %v473 = vsel %vm470, %v458, %v462
        %v477 = vsel %vm470, %v460, %v464
        %s479 = scalar_lea.vmem [#allocation2], 16
        %v480 = vld [vmem:[%s479] sm:$0xf]
        %v481 = vld [vmem:[%s479 + $0x4] sm:$0xf]
        %v484 = vunpack.c.l.b16 %v480
        %v485 = vunpack.c.l.b16 %v481
        %v486 = vpack.c.b16 %v485, %v484
        %v488 = vsel %vm309, %v486, 0
        %490 = vmatprep.subr.bf16.mxu0 %v466
        %491 = vmatpush1.bf16.msra.mxu0 %v473
        %492 = vmatprep.subr.bf16.mxu0 %v467
        %493 = vmatpush1.bf16.msra.mxu0 %v477
        %494 = vmatprep.subr.bf16.mxu0 0
        %495 = vmatpush1.bf16.msra.mxu0 0
        %496 = vmatprep.subr.bf16.mxu0 0
        %497 = vmatpush1.bf16.msra.mxu0 0
        %498 = vmatprep.subr.bf16.mxu0 0
        %499 = vmatpush1.bf16.msra.mxu0 0
        %500 = vmatprep.subr.bf16.mxu0 0
        %501 = vmatpush1.bf16.msra.mxu0 0
        %502 = vmatprep.subr.bf16.mxu0 0
        %503 = vmatpush1.bf16.msra.mxu0 0
        %504 = vmatprep.subr.bf16.mxu0 0
        %505 = vmatpush1.bf16.msra.mxu0 0
        %506 = vmatprep.subr.bf16.mxu0 0
        %507 = vmatpush1.bf16.msra.mxu0 0
        %508 = vmatprep.subr.bf16.mxu0 0
        %509 = vmatpush1.bf16.msra.mxu0 0
        %510 = vmatprep.subr.bf16.mxu0 0
        %511 = vmatpush1.bf16.msra.mxu0 0
        %512 = vmatprep.subr.bf16.mxu0 0
        %513 = vmatpush1.bf16.msra.mxu0 0
        %514 = vmatprep.subr.bf16.mxu0 0
        %515 = vmatpush1.bf16.msra.mxu0 0
        %516 = vmatprep.subr.bf16.mxu0 0
        %517 = vmatpush1.bf16.msra.mxu0 0
        %518 = vmatprep.subr.bf16.mxu0 0
        %519 = vmatpush1.bf16.msra.mxu0 0
        %520 = vmatprep.subr.bf16.mxu0 0
        %521 = vmatpush1.bf16.msra.mxu0 0
        %522 = vmatprep.mubr.bf16.mxu0 0
        %523 = vmatmul.mubr.bf16.gmra.mrb[0].mxu0 %v488
        %v524 = vpop.f32.mrb[0].mxu0
        %v525 = vadd.f32 0.0, %v524
        %v526 = vpop.f32.mrb[0].mxu0
        %v527 = vadd.f32 0.0, %v526
        %v528 = vpop.f32.mrb[0].mxu0
        %v529 = vadd.f32 0.0, %v528
        %v530 = vpop.f32.mrb[0].mxu0
        %v531 = vadd.f32 0.0, %v530
        %532 = vdwg.mxu0
        %vm533 = vmand %vm246, %vm254
        %vm534 = vmand %vm247, %vm255
        %v535 = vsel %vm533, 1, 0
        %v536 = vsel %vm534, 1, 0
        %vm537 = vcmp.eq.s32.totalorder %v535, 1
        %vm538 = vcmp.eq.s32.totalorder %v536, 1
        %v539 = vsel %vm537, %v525, 0.0
        %v540 = vsel %vm538, %v527, 0.0
        %v541 = vsel %vm537, %v529, 0.0
        %v542 = vsel %vm538, %v531, 0.0
        %v543 = vadd.f32 %v453, %v539
        %v544 = vadd.f32 %v454, %v540
        %v545 = vadd.f32 %v455, %v541
        %v546 = vadd.f32 %v456, %v542
        %547 = vrot.lane.b32.xlu0 %v272, 2
        %v548 = vpop.permute.xlu0 %547
        %549 = vrot.lane.b32.xlu0 %v273, 2
        %v550 = vpop.permute.xlu0 %549
        %551 = vrot.lane.b32.xlu0 %v282, 2
        %v552 = vpop.permute.xlu0 %551
        %553 = vrot.lane.b32.xlu0 %v283, 2
        %v554 = vpop.permute.xlu0 %553
        %vm555 = vcmask 15360
        %v556 = vsel %vm555, %v552, %v548
        %v557 = vsel %vm555, %v554, %v550
        %vm560 = vcmask 15360
        %v563 = vsel %vm560, %v548, %v552
        %v567 = vsel %vm560, %v550, %v554
        %s569 = scalar_lea.vmem [#allocation2], 24
        %v570 = vld [vmem:[%s569] sm:$0xf]
        %v571 = vld [vmem:[%s569 + $0x4] sm:$0xf]
        %v574 = vunpack.c.l.b16 %v570
        %v575 = vunpack.c.l.b16 %v571
        %v576 = vpack.c.b16 %v575, %v574
        %v578 = vsel %vm309, %v576, 0
        %580 = vmatprep.subr.bf16.mxu0 %v556
        %581 = vmatpush1.bf16.msra.mxu0 %v563
        %582 = vmatprep.subr.bf16.mxu0 %v557
        %583 = vmatpush1.bf16.msra.mxu0 %v567
        %584 = vmatprep.subr.bf16.mxu0 0
        %585 = vmatpush1.bf16.msra.mxu0 0
        %586 = vmatprep.subr.bf16.mxu0 0
        %587 = vmatpush1.bf16.msra.mxu0 0
        %588 = vmatprep.subr.bf16.mxu0 0
        %589 = vmatpush1.bf16.msra.mxu0 0
        %590 = vmatprep.subr.bf16.mxu0 0
        %591 = vmatpush1.bf16.msra.mxu0 0
        %592 = vmatprep.subr.bf16.mxu0 0
        %593 = vmatpush1.bf16.msra.mxu0 0
        %594 = vmatprep.subr.bf16.mxu0 0
        %595 = vmatpush1.bf16.msra.mxu0 0
        %596 = vmatprep.subr.bf16.mxu0 0
        %597 = vmatpush1.bf16.msra.mxu0 0
        %598 = vmatprep.subr.bf16.mxu0 0
        %599 = vmatpush1.bf16.msra.mxu0 0
        %600 = vmatprep.subr.bf16.mxu0 0
        %601 = vmatpush1.bf16.msra.mxu0 0
        %602 = vmatprep.subr.bf16.mxu0 0
        %603 = vmatpush1.bf16.msra.mxu0 0
        %604 = vmatprep.subr.bf16.mxu0 0
        %605 = vmatpush1.bf16.msra.mxu0 0
        %606 = vmatprep.subr.bf16.mxu0 0
        %607 = vmatpush1.bf16.msra.mxu0 0
        %608 = vmatprep.subr.bf16.mxu0 0
        %609 = vmatpush1.bf16.msra.mxu0 0
        %610 = vmatprep.subr.bf16.mxu0 0
        %611 = vmatpush1.bf16.msra.mxu0 0
        %612 = vmatprep.mubr.bf16.mxu0 0
        %613 = vmatmul.mubr.bf16.gmra.mrb[0].mxu0 %v578
        %v614 = vpop.f32.mrb[0].mxu0
        %v615 = vadd.f32 0.0, %v614
        %v616 = vpop.f32.mrb[0].mxu0
        %v617 = vadd.f32 0.0, %v616
        %v618 = vpop.f32.mrb[0].mxu0
        %v619 = vadd.f32 0.0, %v618
        %v620 = vpop.f32.mrb[0].mxu0
        %v621 = vadd.f32 0.0, %v620
        %622 = vdwg.mxu0
        %v623 = vsel %vm238, 1, 0
        %v624 = vsel %vm239, 1, 0
        %vm625 = vcmp.eq.s32.totalorder %v623, 1
        %vm626 = vcmp.eq.s32.totalorder %v624, 1
        %v627 = vsel %vm625, %v615, 0.0
        %v628 = vsel %vm626, %v617, 0.0
        %v629 = vsel %vm625, %v619, 0.0
        %v630 = vsel %vm626, %v621, 0.0
        %v631 = vadd.f32 %v543, %v627
        %v632 = vadd.f32 %v544, %v628
        %v633 = vadd.f32 %v545, %v629
        %v634 = vadd.f32 %v546, %v630
        %s635 = scalar_lea.vmem [#allocation2], 32
        %v636 = vld [vmem:[%s635] sm:$0xf]
        %v637 = vld [vmem:[%s635 + $0x4] sm:$0xf]
        %v640 = vunpack.c.l.b16 %v636
        %v641 = vunpack.c.l.b16 %v637
        %v642 = vpack.c.b16 %v641, %v640
        %v648 = vsel %vm309, %v642, 0
        %650 = vmatprep.subr.bf16.mxu0 %v272
        %651 = vmatpush1.bf16.msra.mxu0 %v282
        %652 = vmatprep.subr.bf16.mxu0 %v273
        %653 = vmatpush1.bf16.msra.mxu0 %v283
        %654 = vmatprep.subr.bf16.mxu0 0
        %655 = vmatpush1.bf16.msra.mxu0 0
        %656 = vmatprep.subr.bf16.mxu0 0
        %657 = vmatpush1.bf16.msra.mxu0 0
        %658 = vmatprep.subr.bf16.mxu0 0
        %659 = vmatpush1.bf16.msra.mxu0 0
        %660 = vmatprep.subr.bf16.mxu0 0
        %661 = vmatpush1.bf16.msra.mxu0 0
        %662 = vmatprep.subr.bf16.mxu0 0
        %663 = vmatpush1.bf16.msra.mxu0 0
        %664 = vmatprep.subr.bf16.mxu0 0
        %665 = vmatpush1.bf16.msra.mxu0 0
        %666 = vmatprep.subr.bf16.mxu0 0
        %667 = vmatpush1.bf16.msra.mxu0 0
        %668 = vmatprep.subr.bf16.mxu0 0
        %669 = vmatpush1.bf16.msra.mxu0 0
        %670 = vmatprep.subr.bf16.mxu0 0
        %671 = vmatpush1.bf16.msra.mxu0 0
        %672 = vmatprep.subr.bf16.mxu0 0
        %673 = vmatpush1.bf16.msra.mxu0 0
        %674 = vmatprep.subr.bf16.mxu0 0
        %675 = vmatpush1.bf16.msra.mxu0 0
        %676 = vmatprep.subr.bf16.mxu0 0
        %677 = vmatpush1.bf16.msra.mxu0 0
        %678 = vmatprep.subr.bf16.mxu0 0
        %679 = vmatpush1.bf16.msra.mxu0 0
        %680 = vmatprep.subr.bf16.mxu0 0
        %681 = vmatpush1.bf16.msra.mxu0 0
        %682 = vmatprep.mubr.bf16.mxu0 0
        %683 = vmatmul.mubr.bf16.gmra.mrb[0].mxu0 %v648
        %v684 = vpop.f32.mrb[0].mxu0
        %v685 = vadd.f32 0.0, %v684
        %v686 = vpop.f32.mrb[0].mxu0
        %v687 = vadd.f32 0.0, %v686
        %v688 = vpop.f32.mrb[0].mxu0
        %v689 = vadd.f32 0.0, %v688
        %v690 = vpop.f32.mrb[0].mxu0
        %v691 = vadd.f32 0.0, %v690
        %692 = vdwg.mxu0
        %v693 = vadd.f32 %v631, %v685
        %v694 = vadd.f32 %v632, %v687
        %v695 = vadd.f32 %v633, %v689
        %v696 = vadd.f32 %v634, %v691
        %697 = vrot.lane.b32.xlu0 %v282, 126
        %v698 = vpop.permute.xlu0 %697
        %699 = vrot.lane.b32.xlu0 %v272, 126
        %v700 = vpop.permute.xlu0 %699
        %701 = vrot.lane.b32.xlu0 %v283, 126
        %v702 = vpop.permute.xlu0 %701
        %703 = vrot.lane.b32.xlu0 %v273, 126
        %v704 = vpop.permute.xlu0 %703
        %vm705 = vcmask 1031168
        %v706 = vsel %vm705, %v698, %v700
        %v707 = vsel %vm705, %v702, %v704
        %vm710 = vcmask 1031168
        %v713 = vsel %vm710, %v700, %v698
        %v717 = vsel %vm710, %v704, %v702
        %s719 = scalar_lea.vmem [#allocation2], 40
        %v720 = vld [vmem:[%s719] sm:$0xf]
        %v721 = vld [vmem:[%s719 + $0x4] sm:$0xf]
        %v724 = vunpack.c.l.b16 %v720
        %v725 = vunpack.c.l.b16 %v721
        %v726 = vpack.c.b16 %v725, %v724
        %v728 = vsel %vm309, %v726, 0
        %730 = vmatprep.subr.bf16.mxu0 %v713
        %731 = vmatpush1.bf16.msra.mxu0 %v706
        %732 = vmatprep.subr.bf16.mxu0 %v717
        %733 = vmatpush1.bf16.msra.mxu0 %v707
        %734 = vmatprep.subr.bf16.mxu0 0
        %735 = vmatpush1.bf16.msra.mxu0 0
        %736 = vmatprep.subr.bf16.mxu0 0
        %737 = vmatpush1.bf16.msra.mxu0 0
        %738 = vmatprep.subr.bf16.mxu0 0
        %739 = vmatpush1.bf16.msra.mxu0 0
        %740 = vmatprep.subr.bf16.mxu0 0
        %741 = vmatpush1.bf16.msra.mxu0 0
        %742 = vmatprep.subr.bf16.mxu0 0
        %743 = vmatpush1.bf16.msra.mxu0 0
        %744 = vmatprep.subr.bf16.mxu0 0
        %745 = vmatpush1.bf16.msra.mxu0 0
        %746 = vmatprep.subr.bf16.mxu0 0
        %747 = vmatpush1.bf16.msra.mxu0 0
        %748 = vmatprep.subr.bf16.mxu0 0
        %749 = vmatpush1.bf16.msra.mxu0 0
        %750 = vmatprep.subr.bf16.mxu0 0
        %751 = vmatpush1.bf16.msra.mxu0 0
        %752 = vmatprep.subr.bf16.mxu0 0
        %753 = vmatpush1.bf16.msra.mxu0 0
        %754 = vmatprep.subr.bf16.mxu0 0
        %755 = vmatpush1.bf16.msra.mxu0 0
        %756 = vmatprep.subr.bf16.mxu0 0
        %757 = vmatpush1.bf16.msra.mxu0 0
        %758 = vmatprep.subr.bf16.mxu0 0
        %759 = vmatpush1.bf16.msra.mxu0 0
        %760 = vmatprep.subr.bf16.mxu0 0
        %761 = vmatpush1.bf16.msra.mxu0 0
        %762 = vmatprep.mubr.bf16.mxu0 0
        %763 = vmatmul.mubr.bf16.gmra.mrb[0].mxu0 %v728
        %v764 = vpop.f32.mrb[0].mxu0
        %v765 = vadd.f32 0.0, %v764
        %v766 = vpop.f32.mrb[0].mxu0
        %v767 = vadd.f32 0.0, %v766
        %v768 = vpop.f32.mrb[0].mxu0
        %v769 = vadd.f32 0.0, %v768
        %v770 = vpop.f32.mrb[0].mxu0
        %v771 = vadd.f32 0.0, %v770
        %772 = vdwg.mxu0
        %v773 = vsel %vm246, 1, 0
        %v774 = vsel %vm247, 1, 0
        %vm775 = vcmp.eq.s32.totalorder %v773, 1
        %vm776 = vcmp.eq.s32.totalorder %v774, 1
        %v777 = vsel %vm775, %v765, 0.0
        %v778 = vsel %vm776, %v767, 0.0
        %v779 = vsel %vm775, %v769, 0.0
        %v780 = vsel %vm776, %v771, 0.0
        %v781 = vadd.f32 %v693, %v777
        %v782 = vadd.f32 %v694, %v778
        %v783 = vadd.f32 %v695, %v779
        %v784 = vadd.f32 %v696, %v780
        %785 = vrot.lane.b32.xlu0 %v282, 98
        %v786 = vpop.permute.xlu0 %785
        %787 = vrot.lane.b32.xlu0 %v272, 98
        %v788 = vpop.permute.xlu0 %787
        %789 = vrot.lane.b32.xlu0 %v283, 98
        %v790 = vpop.permute.xlu0 %789
        %791 = vrot.lane.b32.xlu0 %v273, 98
        %v792 = vpop.permute.xlu0 %791
        %vm793 = vcmask 801792
        %v794 = vsel %vm793, %v786, %v788
        %v795 = vsel %vm793, %v790, %v792
        %vm798 = vcmask 801792
        %v801 = vsel %vm798, %v788, %v786
        %v805 = vsel %vm798, %v792, %v790
        %s807 = scalar_lea.vmem [#allocation2], 48
        %v808 = vld [vmem:[%s807] sm:$0xf]
        %v809 = vld [vmem:[%s807 + $0x4] sm:$0xf]
        %v812 = vunpack.c.l.b16 %v808
        %v813 = vunpack.c.l.b16 %v809
        %v814 = vpack.c.b16 %v813, %v812
        %v816 = vsel %vm309, %v814, 0
        %818 = vmatprep.subr.bf16.mxu0 %v801
        %819 = vmatpush1.bf16.msra.mxu0 %v794
        %820 = vmatprep.subr.bf16.mxu0 %v805
        %821 = vmatpush1.bf16.msra.mxu0 %v795
        %822 = vmatprep.subr.bf16.mxu0 0
        %823 = vmatpush1.bf16.msra.mxu0 0
        %824 = vmatprep.subr.bf16.mxu0 0
        %825 = vmatpush1.bf16.msra.mxu0 0
        %826 = vmatprep.subr.bf16.mxu0 0
        %827 = vmatpush1.bf16.msra.mxu0 0
        %828 = vmatprep.subr.bf16.mxu0 0
        %829 = vmatpush1.bf16.msra.mxu0 0
        %830 = vmatprep.subr.bf16.mxu0 0
        %831 = vmatpush1.bf16.msra.mxu0 0
        %832 = vmatprep.subr.bf16.mxu0 0
        %833 = vmatpush1.bf16.msra.mxu0 0
        %834 = vmatprep.subr.bf16.mxu0 0
        %835 = vmatpush1.bf16.msra.mxu0 0
        %836 = vmatprep.subr.bf16.mxu0 0
        %837 = vmatpush1.bf16.msra.mxu0 0
        %838 = vmatprep.subr.bf16.mxu0 0
        %839 = vmatpush1.bf16.msra.mxu0 0
        %840 = vmatprep.subr.bf16.mxu0 0
        %841 = vmatpush1.bf16.msra.mxu0 0
        %842 = vmatprep.subr.bf16.mxu0 0
        %843 = vmatpush1.bf16.msra.mxu0 0
        %844 = vmatprep.subr.bf16.mxu0 0
        %845 = vmatpush1.bf16.msra.mxu0 0
        %846 = vmatprep.subr.bf16.mxu0 0
        %847 = vmatpush1.bf16.msra.mxu0 0
        %848 = vmatprep.subr.bf16.mxu0 0
        %849 = vmatpush1.bf16.msra.mxu0 0
        %850 = vmatprep.mubr.bf16.mxu0 0
        %851 = vmatmul.mubr.bf16.gmra.mrb[0].mxu0 %v816
        %v852 = vpop.f32.mrb[0].mxu0
        %v853 = vadd.f32 0.0, %v852
        %v854 = vpop.f32.mrb[0].mxu0
        %v855 = vadd.f32 0.0, %v854
        %v856 = vpop.f32.mrb[0].mxu0
        %v857 = vadd.f32 0.0, %v856
        %v858 = vpop.f32.mrb[0].mxu0
        %v859 = vadd.f32 0.0, %v858
        %860 = vdwg.mxu0
        %vm861 = vmand %vm238, %vm262
        %vm862 = vmand %vm239, %vm263
        %v863 = vsel %vm861, 1, 0
        %v864 = vsel %vm862, 1, 0
        %vm865 = vcmp.eq.s32.totalorder %v863, 1
        %vm866 = vcmp.eq.s32.totalorder %v864, 1
        %v867 = vsel %vm865, %v853, 0.0
        %v868 = vsel %vm866, %v855, 0.0
        %v869 = vsel %vm865, %v857, 0.0
        %v870 = vsel %vm866, %v859, 0.0
        %v871 = vadd.f32 %v781, %v867
        %v872 = vadd.f32 %v782, %v868
        %v873 = vadd.f32 %v783, %v869
        %v874 = vadd.f32 %v784, %v870
        %875 = vrot.lane.b32.xlu0 %v282, 96
        %v876 = vpop.permute.xlu0 %875
        %877 = vrot.lane.b32.xlu0 %v272, 96
        %v878 = vpop.permute.xlu0 %877
        %879 = vrot.lane.b32.xlu0 %v283, 96
        %v880 = vpop.permute.xlu0 %879
        %881 = vrot.lane.b32.xlu0 %v273, 96
        %v882 = vpop.permute.xlu0 %881
        %vm883 = vcmask 785408
        %v884 = vsel %vm883, %v876, %v878
        %v885 = vsel %vm883, %v880, %v882
        %vm888 = vcmask 785408
        %v891 = vsel %vm888, %v878, %v876
        %v895 = vsel %vm888, %v882, %v880
        %s897 = scalar_lea.vmem [#allocation2], 56
        %v898 = vld [vmem:[%s897] sm:$0xf]
        %v899 = vld [vmem:[%s897 + $0x4] sm:$0xf]
        %v902 = vunpack.c.l.b16 %v898
        %v903 = vunpack.c.l.b16 %v899
        %v904 = vpack.c.b16 %v903, %v902
        %v906 = vsel %vm309, %v904, 0
        %908 = vmatprep.subr.bf16.mxu0 %v891
        %909 = vmatpush1.bf16.msra.mxu0 %v884
        %910 = vmatprep.subr.bf16.mxu0 %v895
        %911 = vmatpush1.bf16.msra.mxu0 %v885
        %912 = vmatprep.subr.bf16.mxu0 0
        %913 = vmatpush1.bf16.msra.mxu0 0
        %914 = vmatprep.subr.bf16.mxu0 0
        %915 = vmatpush1.bf16.msra.mxu0 0
        %916 = vmatprep.subr.bf16.mxu0 0
        %917 = vmatpush1.bf16.msra.mxu0 0
        %918 = vmatprep.subr.bf16.mxu0 0
        %919 = vmatpush1.bf16.msra.mxu0 0
        %920 = vmatprep.subr.bf16.mxu0 0
        %921 = vmatpush1.bf16.msra.mxu0 0
        %922 = vmatprep.subr.bf16.mxu0 0
        %923 = vmatpush1.bf16.msra.mxu0 0
        %924 = vmatprep.subr.bf16.mxu0 0
        %925 = vmatpush1.bf16.msra.mxu0 0
        %926 = vmatprep.subr.bf16.mxu0 0
        %927 = vmatpush1.bf16.msra.mxu0 0
        %928 = vmatprep.subr.bf16.mxu0 0
        %929 = vmatpush1.bf16.msra.mxu0 0
        %930 = vmatprep.subr.bf16.mxu0 0
        %931 = vmatpush1.bf16.msra.mxu0 0
        %932 = vmatprep.subr.bf16.mxu0 0
        %933 = vmatpush1.bf16.msra.mxu0 0
        %934 = vmatprep.subr.bf16.mxu0 0
        %935 = vmatpush1.bf16.msra.mxu0 0
        %936 = vmatprep.subr.bf16.mxu0 0
        %937 = vmatpush1.bf16.msra.mxu0 0
        %938 = vmatprep.subr.bf16.mxu0 0
        %939 = vmatpush1.bf16.msra.mxu0 0
        %940 = vmatprep.mubr.bf16.mxu0 0
        %941 = vmatmul.mubr.bf16.gmra.mrb[0].mxu0 %v906
        %v942 = vpop.f32.mrb[0].mxu0
        %v943 = vadd.f32 0.0, %v942
        %v944 = vpop.f32.mrb[0].mxu0
        %v945 = vadd.f32 0.0, %v944
        %v946 = vpop.f32.mrb[0].mxu0
        %v947 = vadd.f32 0.0, %v946
        %v948 = vpop.f32.mrb[0].mxu0
        %v949 = vadd.f32 0.0, %v948
        %950 = vdwg.mxu0
        %v951 = vsel %vm262, 1, 0
        %v952 = vsel %vm263, 1, 0
        %vm953 = vcmp.eq.s32.totalorder %v951, 1
        %vm954 = vcmp.eq.s32.totalorder %v952, 1
        %v955 = vsel %vm953, %v943, 0.0
        %v956 = vsel %vm954, %v945, 0.0
        %v957 = vsel %vm953, %v947, 0.0
        %v958 = vsel %vm954, %v949, 0.0
        %v959 = vadd.f32 %v871, %v955
        %v960 = vadd.f32 %v872, %v956
        %v961 = vadd.f32 %v873, %v957
        %v962 = vadd.f32 %v874, %v958
        %963 = vrot.lane.b32.xlu0 %v282, 94
        %v964 = vpop.permute.xlu0 %963
        %965 = vrot.lane.b32.xlu0 %v272, 94
        %v966 = vpop.permute.xlu0 %965
        %967 = vrot.lane.b32.xlu0 %v283, 94
        %v968 = vpop.permute.xlu0 %967
        %969 = vrot.lane.b32.xlu0 %v273, 94
        %v970 = vpop.permute.xlu0 %969
        %vm971 = vcmask 769024
        %v972 = vsel %vm971, %v964, %v966
        %v973 = vsel %vm971, %v968, %v970
        %vm976 = vcmask 769024
        %v979 = vsel %vm976, %v966, %v964
        %v983 = vsel %vm976, %v970, %v968
        %s985 = scalar_lea.vmem [#allocation2], 64
        %v986 = vld [vmem:[%s985] sm:$0xf]
        %v987 = vld [vmem:[%s985 + $0x4] sm:$0xf]
        %v990 = vunpack.c.l.b16 %v986
        %v991 = vunpack.c.l.b16 %v987
        %v992 = vpack.c.b16 %v991, %v990
        %v994 = vsel %vm309, %v992, 0
        %996 = vmatprep.subr.bf16.mxu0 %v979
        %997 = vmatpush1.bf16.msra.mxu0 %v972
        %998 = vmatprep.subr.bf16.mxu0 %v983
        %999 = vmatpush1.bf16.msra.mxu0 %v973
        %1000 = vmatprep.subr.bf16.mxu0 0
        %1001 = vmatpush1.bf16.msra.mxu0 0
        %1002 = vmatprep.subr.bf16.mxu0 0
        %1003 = vmatpush1.bf16.msra.mxu0 0
        %1004 = vmatprep.subr.bf16.mxu0 0
        %1005 = vmatpush1.bf16.msra.mxu0 0
        %1006 = vmatprep.subr.bf16.mxu0 0
        %1007 = vmatpush1.bf16.msra.mxu0 0
        %1008 = vmatprep.subr.bf16.mxu0 0
        %1009 = vmatpush1.bf16.msra.mxu0 0
        %1010 = vmatprep.subr.bf16.mxu0 0
        %1011 = vmatpush1.bf16.msra.mxu0 0
        %1012 = vmatprep.subr.bf16.mxu0 0
        %1013 = vmatpush1.bf16.msra.mxu0 0
        %1014 = vmatprep.subr.bf16.mxu0 0
        %1015 = vmatpush1.bf16.msra.mxu0 0
        %1016 = vmatprep.subr.bf16.mxu0 0
        %1017 = vmatpush1.bf16.msra.mxu0 0
        %1018 = vmatprep.subr.bf16.mxu0 0
        %1019 = vmatpush1.bf16.msra.mxu0 0
        %1020 = vmatprep.subr.bf16.mxu0 0
        %1021 = vmatpush1.bf16.msra.mxu0 0
        %1022 = vmatprep.subr.bf16.mxu0 0
        %1023 = vmatpush1.bf16.msra.mxu0 0
        %1024 = vmatprep.subr.bf16.mxu0 0
        %1025 = vmatpush1.bf16.msra.mxu0 0
        %1026 = vmatprep.subr.bf16.mxu0 0
        %1027 = vmatpush1.bf16.msra.mxu0 0
        %1028 = vmatprep.mubr.bf16.mxu0 0
        %1029 = vmatmul.mubr.bf16.gmra.mrb[0].mxu0 %v994
        %v1030 = vpop.f32.mrb[0].mxu0
        %v1031 = vadd.f32 0.0, %v1030
        %v1032 = vpop.f32.mrb[0].mxu0
        %v1033 = vadd.f32 0.0, %v1032
        %v1034 = vpop.f32.mrb[0].mxu0
        %v1035 = vadd.f32 0.0, %v1034
        %v1036 = vpop.f32.mrb[0].mxu0
        %v1037 = vadd.f32 0.0, %v1036
        %1038 = vdwg.mxu0
        %vm1039 = vmand %vm246, %vm262
        %vm1040 = vmand %vm247, %vm263
        %v1041 = vsel %vm1039, 1, 0
        %v1042 = vsel %vm1040, 1, 0
        %vm1043 = vcmp.eq.s32.totalorder %v1041, 1
        %vm1044 = vcmp.eq.s32.totalorder %v1042, 1
        %v1045 = vsel %vm1043, %v1031, 0.0
        %v1046 = vsel %vm1044, %v1033, 0.0
        %v1047 = vsel %vm1043, %v1035, 0.0
        %v1048 = vsel %vm1044, %v1037, 0.0
        %v1049 = vadd.f32 %v959, %v1045
        %v1050 = vadd.f32 %v960, %v1046
        %v1051 = vadd.f32 %v961, %v1047
        %v1052 = vadd.f32 %v962, %v1048
        %v1053 = vadd.f32 %v230, -4.0
        %v1054 = vadd.f32 %v231, -4.0
        %vm1055 = vcmp.ge.f32.partialorder %v1053, 0.0
        %vm1056 = vcmp.ge.f32.partialorder %v1054, 0.0
        %vm1057 = vcmp.le.f32.partialorder %v1053, 15.0
        %vm1058 = vcmp.le.f32.partialorder %v1054, 15.0
        %vm1059 = vmand %vm1055, %vm1057
        %vm1060 = vmand %vm1056, %vm1058
        %v1061 = vadd.f32 %v230, 4.0
        %v1062 = vadd.f32 %v231, 4.0
        %vm1063 = vcmp.ge.f32.partialorder %v1061, 0.0
        %vm1064 = vcmp.ge.f32.partialorder %v1062, 0.0
        %vm1065 = vcmp.le.f32.partialorder %v1061, 15.0
        %vm1066 = vcmp.le.f32.partialorder %v1062, 15.0
        %vm1067 = vmand %vm1063, %vm1065
        %vm1068 = vmand %vm1064, %vm1066
        %v1069 = vadd.f32 %v226, -4.0
        %v1070 = vadd.f32 %v227, -4.0
        %vm1071 = vcmp.ge.f32.partialorder %v1069, 0.0
        %vm1072 = vcmp.ge.f32.partialorder %v1070, 0.0
        %vm1073 = vcmp.le.f32.partialorder %v1069, 15.0
        %vm1074 = vcmp.le.f32.partialorder %v1070, 15.0
        %vm1075 = vmand %vm1071, %vm1073
        %vm1076 = vmand %vm1072, %vm1074
        %v1077 = vadd.f32 %v226, 4.0
        %v1078 = vadd.f32 %v227, 4.0
        %vm1079 = vcmp.ge.f32.partialorder %v1077, 0.0
        %vm1080 = vcmp.ge.f32.partialorder %v1078, 0.0
        %vm1081 = vcmp.le.f32.partialorder %v1077, 15.0
        %vm1082 = vcmp.le.f32.partialorder %v1078, 15.0
        %vm1083 = vmand %vm1079, %vm1081
        %vm1084 = vmand %vm1080, %vm1082
        %1085 = vrot.lane.b32.xlu0 %v272, 68
        %v1086 = vpop.permute.xlu0 %1085
        %1087 = vrot.lane.b32.xlu0 %v273, 68
        %v1088 = vpop.permute.xlu0 %1087
        %1089 = vrot.lane.b32.xlu0 %v282, 68
        %v1090 = vpop.permute.xlu0 %1089
        %1091 = vrot.lane.b32.xlu0 %v283, 68
        %v1092 = vpop.permute.xlu0 %1091
        %vm1093 = vcmask 556032
        %v1094 = vsel %vm1093, %v1090, %v1086
        %v1095 = vsel %vm1093, %v1092, %v1088
        %vm1098 = vcmask 556032
        %v1101 = vsel %vm1098, %v1086, %v1090
        %v1105 = vsel %vm1098, %v1088, %v1092
        %s1107 = scalar_lea.vmem [#allocation2], 72
        %v1108 = vld [vmem:[%s1107] sm:$0xf]
        %v1109 = vld [vmem:[%s1107 + $0x4] sm:$0xf]
        %v1112 = vunpack.c.l.b16 %v1108
        %v1113 = vunpack.c.l.b16 %v1109
        %v1114 = vpack.c.b16 %v1113, %v1112
        %v1116 = vsel %vm309, %v1114, 0
        %1118 = vmatprep.subr.bf16.mxu0 %v1094
        %1119 = vmatpush1.bf16.msra.mxu0 %v1101
        %1120 = vmatprep.subr.bf16.mxu0 %v1095
        %1121 = vmatpush1.bf16.msra.mxu0 %v1105
        %1122 = vmatprep.subr.bf16.mxu0 0
        %1123 = vmatpush1.bf16.msra.mxu0 0
        %1124 = vmatprep.subr.bf16.mxu0 0
        %1125 = vmatpush1.bf16.msra.mxu0 0
        %1126 = vmatprep.subr.bf16.mxu0 0
        %1127 = vmatpush1.bf16.msra.mxu0 0
        %1128 = vmatprep.subr.bf16.mxu0 0
        %1129 = vmatpush1.bf16.msra.mxu0 0
        %1130 = vmatprep.subr.bf16.mxu0 0
        %1131 = vmatpush1.bf16.msra.mxu0 0
        %1132 = vmatprep.subr.bf16.mxu0 0
        %1133 = vmatpush1.bf16.msra.mxu0 0
        %1134 = vmatprep.subr.bf16.mxu0 0
        %1135 = vmatpush1.bf16.msra.mxu0 0
        %1136 = vmatprep.subr.bf16.mxu0 0
        %1137 = vmatpush1.bf16.msra.mxu0 0
        %1138 = vmatprep.subr.bf16.mxu0 0
        %1139 = vmatpush1.bf16.msra.mxu0 0
        %1140 = vmatprep.subr.bf16.mxu0 0
        %1141 = vmatpush1.bf16.msra.mxu0 0
        %1142 = vmatprep.subr.bf16.mxu0 0
        %1143 = vmatpush1.bf16.msra.mxu0 0
        %1144 = vmatprep.subr.bf16.mxu0 0
        %1145 = vmatpush1.bf16.msra.mxu0 0
        %1146 = vmatprep.subr.bf16.mxu0 0
        %1147 = vmatpush1.bf16.msra.mxu0 0
        %1148 = vmatprep.subr.bf16.mxu0 0
        %1149 = vmatpush1.bf16.msra.mxu0 0
        %1150 = vmatprep.mubr.bf16.mxu0 0
        %1151 = vmatmul.mubr.bf16.gmra.mrb[0].mxu0 %v1116
        %v1152 = vpop.f32.mrb[0].mxu0
        %v1153 = vadd.f32 0.0, %v1152
        %v1154 = vpop.f32.mrb[0].mxu0
        %v1155 = vadd.f32 0.0, %v1154
        %v1156 = vpop.f32.mrb[0].mxu0
        %v1157 = vadd.f32 0.0, %v1156
        %v1158 = vpop.f32.mrb[0].mxu0
        %v1159 = vadd.f32 0.0, %v1158
        %1160 = vdwg.mxu0
        %vm1161 = vmand %vm1059, %vm1075
        %vm1162 = vmand %vm1060, %vm1076
        %v1163 = vsel %vm1161, 1, 0
        %v1164 = vsel %vm1162, 1, 0
        %vm1165 = vcmp.eq.s32.totalorder %v1163, 1
        %vm1166 = vcmp.eq.s32.totalorder %v1164, 1
        %v1167 = vsel %vm1165, %v1153, 0.0
        %v1168 = vsel %vm1166, %v1155, 0.0
        %v1169 = vsel %vm1165, %v1157, 0.0
        %v1170 = vsel %vm1166, %v1159, 0.0
        %v1171 = vadd.f32 %v1167, 0.0
        %v1172 = vadd.f32 %v1168, 0.0
        %v1173 = vadd.f32 %v1169, 0.0
        %v1174 = vadd.f32 %v1170, 0.0
        %1175 = vrot.lane.b32.xlu0 %v272, 64
        %v1176 = vpop.permute.xlu0 %1175
        %1177 = vrot.lane.b32.xlu0 %v273, 64
        %v1178 = vpop.permute.xlu0 %1177
        %1179 = vrot.lane.b32.xlu0 %v282, 64
        %v1180 = vpop.permute.xlu0 %1179
        %1181 = vrot.lane.b32.xlu0 %v283, 64
        %v1182 = vpop.permute.xlu0 %1181
        %vm1183 = vcmask 523264
        %v1184 = vsel %vm1183, %v1180, %v1176
        %v1185 = vsel %vm1183, %v1182, %v1178
        %vm1188 = vcmask 523264
        %v1191 = vsel %vm1188, %v1176, %v1180
        %v1195 = vsel %vm1188, %v1178, %v1182
        %s1197 = scalar_lea.vmem [#allocation2], 80
        %v1198 = vld [vmem:[%s1197] sm:$0xf]
        %v1199 = vld [vmem:[%s1197 + $0x4] sm:$0xf]
        %v1202 = vunpack.c.l.b16 %v1198
        %v1203 = vunpack.c.l.b16 %v1199
        %v1204 = vpack.c.b16 %v1203, %v1202
        %v1206 = vsel %vm309, %v1204, 0
        %1208 = vmatprep.subr.bf16.mxu0 %v1184
        %1209 = vmatpush1.bf16.msra.mxu0 %v1191
        %1210 = vmatprep.subr.bf16.mxu0 %v1185
        %1211 = vmatpush1.bf16.msra.mxu0 %v1195
        %1212 = vmatprep.subr.bf16.mxu0 0
        %1213 = vmatpush1.bf16.msra.mxu0 0
        %1214 = vmatprep.subr.bf16.mxu0 0
        %1215 = vmatpush1.bf16.msra.mxu0 0
        %1216 = vmatprep.subr.bf16.mxu0 0
        %1217 = vmatpush1.bf16.msra.mxu0 0
        %1218 = vmatprep.subr.bf16.mxu0 0
        %1219 = vmatpush1.bf16.msra.mxu0 0
        %1220 = vmatprep.subr.bf16.mxu0 0
        %1221 = vmatpush1.bf16.msra.mxu0 0
        %1222 = vmatprep.subr.bf16.mxu0 0
        %1223 = vmatpush1.bf16.msra.mxu0 0
        %1224 = vmatprep.subr.bf16.mxu0 0
        %1225 = vmatpush1.bf16.msra.mxu0 0
        %1226 = vmatprep.subr.bf16.mxu0 0
        %1227 = vmatpush1.bf16.msra.mxu0 0
        %1228 = vmatprep.subr.bf16.mxu0 0
        %1229 = vmatpush1.bf16.msra.mxu0 0
        %1230 = vmatprep.subr.bf16.mxu0 0
        %1231 = vmatpush1.bf16.msra.mxu0 0
        %1232 = vmatprep.subr.bf16.mxu0 0
        %1233 = vmatpush1.bf16.msra.mxu0 0
        %1234 = vmatprep.subr.bf16.mxu0 0
        %1235 = vmatpush1.bf16.msra.mxu0 0
        %1236 = vmatprep.subr.bf16.mxu0 0
        %1237 = vmatpush1.bf16.msra.mxu0 0
        %1238 = vmatprep.subr.bf16.mxu0 0
        %1239 = vmatpush1.bf16.msra.mxu0 0
        %1240 = vmatprep.mubr.bf16.mxu0 0
        %1241 = vmatmul.mubr.bf16.gmra.mrb[0].mxu0 %v1206
        %v1242 = vpop.f32.mrb[0].mxu0
        %v1243 = vadd.f32 0.0, %v1242
        %v1244 = vpop.f32.mrb[0].mxu0
        %v1245 = vadd.f32 0.0, %v1244
        %v1246 = vpop.f32.mrb[0].mxu0
        %v1247 = vadd.f32 0.0, %v1246
        %v1248 = vpop.f32.mrb[0].mxu0
        %v1249 = vadd.f32 0.0, %v1248
        %1250 = vdwg.mxu0
        %v1251 = vsel %vm1075, 1, 0
        %v1252 = vsel %vm1076, 1, 0
        %vm1253 = vcmp.eq.s32.totalorder %v1251, 1
        %vm1254 = vcmp.eq.s32.totalorder %v1252, 1
        %v1255 = vsel %vm1253, %v1243, 0.0
        %v1256 = vsel %vm1254, %v1245, 0.0
        %v1257 = vsel %vm1253, %v1247, 0.0
        %v1258 = vsel %vm1254, %v1249, 0.0
        %v1259 = vadd.f32 %v1171, %v1255
        %v1260 = vadd.f32 %v1172, %v1256
        %v1261 = vadd.f32 %v1173, %v1257
        %v1262 = vadd.f32 %v1174, %v1258
        %1263 = vrot.lane.b32.xlu0 %v272, 60
        %v1264 = vpop.permute.xlu0 %1263
        %1265 = vrot.lane.b32.xlu0 %v273, 60
        %v1266 = vpop.permute.xlu0 %1265
        %1267 = vrot.lane.b32.xlu0 %v282, 60
        %v1268 = vpop.permute.xlu0 %1267
        %1269 = vrot.lane.b32.xlu0 %v283, 60
        %v1270 = vpop.permute.xlu0 %1269
        %vm1271 = vcmask 490496
        %v1272 = vsel %vm1271, %v1268, %v1264
        %v1273 = vsel %vm1271, %v1270, %v1266
        %vm1276 = vcmask 490496
        %v1279 = vsel %vm1276, %v1264, %v1268
        %v1283 = vsel %vm1276, %v1266, %v1270
        %s1285 = scalar_lea.vmem [#allocation2], 88
        %v1286 = vld [vmem:[%s1285] sm:$0xf]
        %v1287 = vld [vmem:[%s1285 + $0x4] sm:$0xf]
        %v1290 = vunpack.c.l.b16 %v1286
        %v1291 = vunpack.c.l.b16 %v1287
        %v1292 = vpack.c.b16 %v1291, %v1290
        %v1294 = vsel %vm309, %v1292, 0
        %1296 = vmatprep.subr.bf16.mxu0 %v1272
        %1297 = vmatpush1.bf16.msra.mxu0 %v1279
        %1298 = vmatprep.subr.bf16.mxu0 %v1273
        %1299 = vmatpush1.bf16.msra.mxu0 %v1283
        %1300 = vmatprep.subr.bf16.mxu0 0
        %1301 = vmatpush1.bf16.msra.mxu0 0
        %1302 = vmatprep.subr.bf16.mxu0 0
        %1303 = vmatpush1.bf16.msra.mxu0 0
        %1304 = vmatprep.subr.bf16.mxu0 0
        %1305 = vmatpush1.bf16.msra.mxu0 0
        %1306 = vmatprep.subr.bf16.mxu0 0
        %1307 = vmatpush1.bf16.msra.mxu0 0
        %1308 = vmatprep.subr.bf16.mxu0 0
        %1309 = vmatpush1.bf16.msra.mxu0 0
        %1310 = vmatprep.subr.bf16.mxu0 0
        %1311 = vmatpush1.bf16.msra.mxu0 0
        %1312 = vmatprep.subr.bf16.mxu0 0
        %1313 = vmatpush1.bf16.msra.mxu0 0
        %1314 = vmatprep.subr.bf16.mxu0 0
        %1315 = vmatpush1.bf16.msra.mxu0 0
        %1316 = vmatprep.subr.bf16.mxu0 0
        %1317 = vmatpush1.bf16.msra.mxu0 0
        %1318 = vmatprep.subr.bf16.mxu0 0
        %1319 = vmatpush1.bf16.msra.mxu0 0
        %1320 = vmatprep.subr.bf16.mxu0 0
        %1321 = vmatpush1.bf16.msra.mxu0 0
        %1322 = vmatprep.subr.bf16.mxu0 0
        %1323 = vmatpush1.bf16.msra.mxu0 0
        %1324 = vmatprep.subr.bf16.mxu0 0
        %1325 = vmatpush1.bf16.msra.mxu0 0
        %1326 = vmatprep.subr.bf16.mxu0 0
        %1327 = vmatpush1.bf16.msra.mxu0 0
        %1328 = vmatprep.mubr.bf16.mxu0 0
        %1329 = vmatmul.mubr.bf16.gmra.mrb[0].mxu0 %v1294
        %v1330 = vpop.f32.mrb[0].mxu0
        %v1331 = vadd.f32 0.0, %v1330
        %v1332 = vpop.f32.mrb[0].mxu0
        %v1333 = vadd.f32 0.0, %v1332
        %v1334 = vpop.f32.mrb[0].mxu0
        %v1335 = vadd.f32 0.0, %v1334
        %v1336 = vpop.f32.mrb[0].mxu0
        %v1337 = vadd.f32 0.0, %v1336
        %1338 = vdwg.mxu0
        %vm1339 = vmand %vm1067, %vm1075
        %vm1340 = vmand %vm1068, %vm1076
        %v1341 = vsel %vm1339, 1, 0
        %v1342 = vsel %vm1340, 1, 0
        %vm1343 = vcmp.eq.s32.totalorder %v1341, 1
        %vm1344 = vcmp.eq.s32.totalorder %v1342, 1
        %v1345 = vsel %vm1343, %v1331, 0.0
        %v1346 = vsel %vm1344, %v1333, 0.0
        %v1347 = vsel %vm1343, %v1335, 0.0
        %v1348 = vsel %vm1344, %v1337, 0.0
        %v1349 = vadd.f32 %v1259, %v1345
        %v1350 = vadd.f32 %v1260, %v1346
        %v1351 = vadd.f32 %v1261, %v1347
        %v1352 = vadd.f32 %v1262, %v1348
        %1353 = vrot.lane.b32.xlu0 %v272, 4
        %v1354 = vpop.permute.xlu0 %1353
        %1355 = vrot.lane.b32.xlu0 %v273, 4
        %v1356 = vpop.permute.xlu0 %1355
        %1357 = vrot.lane.b32.xlu0 %v282, 4
        %v1358 = vpop.permute.xlu0 %1357
        %1359 = vrot.lane.b32.xlu0 %v283, 4
        %v1360 = vpop.permute.xlu0 %1359
        %vm1361 = vcmask 31744
        %v1362 = vsel %vm1361, %v1358, %v1354
        %v1363 = vsel %vm1361, %v1360, %v1356
        %vm1366 = vcmask 31744
        %v1369 = vsel %vm1366, %v1354, %v1358
        %v1373 = vsel %vm1366, %v1356, %v1360
        %s1375 = scalar_lea.vmem [#allocation2], 96
        %v1376 = vld [vmem:[%s1375] sm:$0xf]
        %v1377 = vld [vmem:[%s1375 + $0x4] sm:$0xf]
        %v1380 = vunpack.c.l.b16 %v1376
        %v1381 = vunpack.c.l.b16 %v1377
        %v1382 = vpack.c.b16 %v1381, %v1380
        %v1384 = vsel %vm309, %v1382, 0
        %1386 = vmatprep.subr.bf16.mxu0 %v1362
        %1387 = vmatpush1.bf16.msra.mxu0 %v1369
        %1388 = vmatprep.subr.bf16.mxu0 %v1363
        %1389 = vmatpush1.bf16.msra.mxu0 %v1373
        %1390 = vmatprep.subr.bf16.mxu0 0
        %1391 = vmatpush1.bf16.msra.mxu0 0
        %1392 = vmatprep.subr.bf16.mxu0 0
        %1393 = vmatpush1.bf16.msra.mxu0 0
        %1394 = vmatprep.subr.bf16.mxu0 0
        %1395 = vmatpush1.bf16.msra.mxu0 0
        %1396 = vmatprep.subr.bf16.mxu0 0
        %1397 = vmatpush1.bf16.msra.mxu0 0
        %1398 = vmatprep.subr.bf16.mxu0 0
        %1399 = vmatpush1.bf16.msra.mxu0 0
        %1400 = vmatprep.subr.bf16.mxu0 0
        %1401 = vmatpush1.bf16.msra.mxu0 0
        %1402 = vmatprep.subr.bf16.mxu0 0
        %1403 = vmatpush1.bf16.msra.mxu0 0
        %1404 = vmatprep.subr.bf16.mxu0 0
        %1405 = vmatpush1.bf16.msra.mxu0 0
        %1406 = vmatprep.subr.bf16.mxu0 0
        %1407 = vmatpush1.bf16.msra.mxu0 0
        %1408 = vmatprep.subr.bf16.mxu0 0
        %1409 = vmatpush1.bf16.msra.mxu0 0
        %1410 = vmatprep.subr.bf16.mxu0 0
        %1411 = vmatpush1.bf16.msra.mxu0 0
        %1412 = vmatprep.subr.bf16.mxu0 0
        %1413 = vmatpush1.bf16.msra.mxu0 0
        %1414 = vmatprep.subr.bf16.mxu0 0
        %1415 = vmatpush1.bf16.msra.mxu0 0
        %1416 = vmatprep.subr.bf16.mxu0 0
        %1417 = vmatpush1.bf16.msra.mxu0 0
        %1418 = vmatprep.mubr.bf16.mxu0 0
        %1419 = vmatmul.mubr.bf16.gmra.mrb[0].mxu0 %v1384
        %v1420 = vpop.f32.mrb[0].mxu0
        %v1421 = vadd.f32 0.0, %v1420
        %v1422 = vpop.f32.mrb[0].mxu0
        %v1423 = vadd.f32 0.0, %v1422
        %v1424 = vpop.f32.mrb[0].mxu0
        %v1425 = vadd.f32 0.0, %v1424
        %v1426 = vpop.f32.mrb[0].mxu0
        %v1427 = vadd.f32 0.0, %v1426
        %1428 = vdwg.mxu0
        %v1429 = vsel %vm1059, 1, 0
        %v1430 = vsel %vm1060, 1, 0
        %vm1431 = vcmp.eq.s32.totalorder %v1429, 1
        %vm1432 = vcmp.eq.s32.totalorder %v1430, 1
        %v1433 = vsel %vm1431, %v1421, 0.0
        %v1434 = vsel %vm1432, %v1423, 0.0
        %v1435 = vsel %vm1431, %v1425, 0.0
        %v1436 = vsel %vm1432, %v1427, 0.0
        %v1437 = vadd.f32 %v1349, %v1433
        %v1438 = vadd.f32 %v1350, %v1434
        %v1439 = vadd.f32 %v1351, %v1435
        %v1440 = vadd.f32 %v1352, %v1436
        %s1441 = scalar_lea.vmem [#allocation2], 104
        %v1442 = vld [vmem:[%s1441] sm:$0xf]
        %v1443 = vld [vmem:[%s1441 + $0x4] sm:$0xf]
        %v1446 = vunpack.c.l.b16 %v1442
        %v1447 = vunpack.c.l.b16 %v1443
        %v1448 = vpack.c.b16 %v1447, %v1446
        %v1450 = vsel %vm309, %v1448, 0
        %1452 = vmatprep.subr.bf16.mxu0 %v272
        %1453 = vmatpush1.bf16.msra.mxu0 %v282
        %1454 = vmatprep.subr.bf16.mxu0 %v273
        %1455 = vmatpush1.bf16.msra.mxu0 %v283
        %1456 = vmatprep.subr.bf16.mxu0 0
        %1457 = vmatpush1.bf16.msra.mxu0 0
        %1458 = vmatprep.subr.bf16.mxu0 0
        %1459 = vmatpush1.bf16.msra.mxu0 0
        %1460 = vmatprep.subr.bf16.mxu0 0
        %1461 = vmatpush1.bf16.msra.mxu0 0
        %1462 = vmatprep.subr.bf16.mxu0 0
        %1463 = vmatpush1.bf16.msra.mxu0 0
        %1464 = vmatprep.subr.bf16.mxu0 0
        %1465 = vmatpush1.bf16.msra.mxu0 0
        %1466 = vmatprep.subr.bf16.mxu0 0
        %1467 = vmatpush1.bf16.msra.mxu0 0
        %1468 = vmatprep.subr.bf16.mxu0 0
        %1469 = vmatpush1.bf16.msra.mxu0 0
        %1470 = vmatprep.subr.bf16.mxu0 0
        %1471 = vmatpush1.bf16.msra.mxu0 0
        %1472 = vmatprep.subr.bf16.mxu0 0
        %1473 = vmatpush1.bf16.msra.mxu0 0
        %1474 = vmatprep.subr.bf16.mxu0 0
        %1475 = vmatpush1.bf16.msra.mxu0 0
        %1476 = vmatprep.subr.bf16.mxu0 0
        %1477 = vmatpush1.bf16.msra.mxu0 0
        %1478 = vmatprep.subr.bf16.mxu0 0
        %1479 = vmatpush1.bf16.msra.mxu0 0
        %1480 = vmatprep.subr.bf16.mxu0 0
        %1481 = vmatpush1.bf16.msra.mxu0 0
        %1482 = vmatprep.subr.bf16.mxu0 0
        %1483 = vmatpush1.bf16.msra.mxu0 0
        %1484 = vmatprep.mubr.bf16.mxu0 0
        %1485 = vmatmul.mubr.bf16.gmra.mrb[0].mxu0 %v1450
        %v1486 = vpop.f32.mrb[0].mxu0
        %v1487 = vadd.f32 0.0, %v1486
        %v1488 = vpop.f32.mrb[0].mxu0
        %v1489 = vadd.f32 0.0, %v1488
        %v1490 = vpop.f32.mrb[0].mxu0
        %v1491 = vadd.f32 0.0, %v1490
        %v1492 = vpop.f32.mrb[0].mxu0
        %v1493 = vadd.f32 0.0, %v1492
        %1494 = vdwg.mxu0
        %v1495 = vadd.f32 %v1437, %v1487
        %v1496 = vadd.f32 %v1438, %v1489
        %v1497 = vadd.f32 %v1439, %v1491
        %v1498 = vadd.f32 %v1440, %v1493
        %1499 = vrot.lane.b32.xlu0 %v282, 124
        %v1500 = vpop.permute.xlu0 %1499
        %1501 = vrot.lane.b32.xlu0 %v272, 124
        %v1502 = vpop.permute.xlu0 %1501
        %1503 = vrot.lane.b32.xlu0 %v283, 124
        %v1504 = vpop.permute.xlu0 %1503
        %1505 = vrot.lane.b32.xlu0 %v273, 124
        %v1506 = vpop.permute.xlu0 %1505
        %vm1507 = vcmask 1014784
        %v1508 = vsel %vm1507, %v1500, %v1502
        %v1509 = vsel %vm1507, %v1504, %v1506
        %vm1512 = vcmask 1014784
        %v1515 = vsel %vm1512, %v1502, %v1500
        %v1519 = vsel %vm1512, %v1506, %v1504
        %s1521 = scalar_lea.vmem [#allocation2], 112
        %v1522 = vld [vmem:[%s1521] sm:$0xf]
        %v1523 = vld [vmem:[%s1521 + $0x4] sm:$0xf]
        %v1526 = vunpack.c.l.b16 %v1522
        %v1527 = vunpack.c.l.b16 %v1523
        %v1528 = vpack.c.b16 %v1527, %v1526
        %v1530 = vsel %vm309, %v1528, 0
        %1532 = vmatprep.subr.bf16.mxu0 %v1515
        %1533 = vmatpush1.bf16.msra.mxu0 %v1508
        %1534 = vmatprep.subr.bf16.mxu0 %v1519
        %1535 = vmatpush1.bf16.msra.mxu0 %v1509
        %1536 = vmatprep.subr.bf16.mxu0 0
        %1537 = vmatpush1.bf16.msra.mxu0 0
        %1538 = vmatprep.subr.bf16.mxu0 0
        %1539 = vmatpush1.bf16.msra.mxu0 0
        %1540 = vmatprep.subr.bf16.mxu0 0
        %1541 = vmatpush1.bf16.msra.mxu0 0
        %1542 = vmatprep.subr.bf16.mxu0 0
        %1543 = vmatpush1.bf16.msra.mxu0 0
        %1544 = vmatprep.subr.bf16.mxu0 0
        %1545 = vmatpush1.bf16.msra.mxu0 0
        %1546 = vmatprep.subr.bf16.mxu0 0
        %1547 = vmatpush1.bf16.msra.mxu0 0
        %1548 = vmatprep.subr.bf16.mxu0 0
        %1549 = vmatpush1.bf16.msra.mxu0 0
        %1550 = vmatprep.subr.bf16.mxu0 0
        %1551 = vmatpush1.bf16.msra.mxu0 0
        %1552 = vmatprep.subr.bf16.mxu0 0
        %1553 = vmatpush1.bf16.msra.mxu0 0
        %1554 = vmatprep.subr.bf16.mxu0 0
        %1555 = vmatpush1.bf16.msra.mxu0 0
        %1556 = vmatprep.subr.bf16.mxu0 0
        %1557 = vmatpush1.bf16.msra.mxu0 0
        %1558 = vmatprep.subr.bf16.mxu0 0
        %1559 = vmatpush1.bf16.msra.mxu0 0
        %1560 = vmatprep.subr.bf16.mxu0 0
        %1561 = vmatpush1.bf16.msra.mxu0 0
        %1562 = vmatprep.subr.bf16.mxu0 0
        %1563 = vmatpush1.bf16.msra.mxu0 0
        %1564 = vmatprep.mubr.bf16.mxu0 0
        %1565 = vmatmul.mubr.bf16.gmra.mrb[0].mxu0 %v1530
        %v1566 = vpop.f32.mrb[0].mxu0
        %v1567 = vadd.f32 0.0, %v1566
        %v1568 = vpop.f32.mrb[0].mxu0
        %v1569 = vadd.f32 0.0, %v1568
        %v1570 = vpop.f32.mrb[0].mxu0
        %v1571 = vadd.f32 0.0, %v1570
        %v1572 = vpop.f32.mrb[0].mxu0
        %v1573 = vadd.f32 0.0, %v1572
        %1574 = vdwg.mxu0
        %v1575 = vsel %vm1067, 1, 0
        %v1576 = vsel %vm1068, 1, 0
        %vm1577 = vcmp.eq.s32.totalorder %v1575, 1
        %vm1578 = vcmp.eq.s32.totalorder %v1576, 1
        %v1579 = vsel %vm1577, %v1567, 0.0
        %v1580 = vsel %vm1578, %v1569, 0.0
        %v1581 = vsel %vm1577, %v1571, 0.0
        %v1582 = vsel %vm1578, %v1573, 0.0
        %v1583 = vadd.f32 %v1495, %v1579
        %v1584 = vadd.f32 %v1496, %v1580
        %v1585 = vadd.f32 %v1497, %v1581
        %v1586 = vadd.f32 %v1498, %v1582
        %s1587 = scalar_lea.vmem [#allocation2], 120
        %v1588 = vld [vmem:[%s1587] sm:$0xf]
        %v1589 = vld [vmem:[%s1587 + $0x4] sm:$0xf]
        %v1592 = vunpack.c.l.b16 %v1588
        %v1593 = vunpack.c.l.b16 %v1589
        %v1594 = vpack.c.b16 %v1593, %v1592
        %v1596 = vsel %vm309, %v1594, 0
        %1598 = vmatprep.subr.bf16.mxu0 %v1101
        %1599 = vmatpush1.bf16.msra.mxu0 %v1094
        %1600 = vmatprep.subr.bf16.mxu0 %v1105
        %1601 = vmatpush1.bf16.msra.mxu0 %v1095
        %1602 = vmatprep.subr.bf16.mxu0 0
        %1603 = vmatpush1.bf16.msra.mxu0 0
        %1604 = vmatprep.subr.bf16.mxu0 0
        %1605 = vmatpush1.bf16.msra.mxu0 0
        %1606 = vmatprep.subr.bf16.mxu0 0
        %1607 = vmatpush1.bf16.msra.mxu0 0
        %1608 = vmatprep.subr.bf16.mxu0 0
        %1609 = vmatpush1.bf16.msra.mxu0 0
        %1610 = vmatprep.subr.bf16.mxu0 0
        %1611 = vmatpush1.bf16.msra.mxu0 0
        %1612 = vmatprep.subr.bf16.mxu0 0
        %1613 = vmatpush1.bf16.msra.mxu0 0
        %1614 = vmatprep.subr.bf16.mxu0 0
        %1615 = vmatpush1.bf16.msra.mxu0 0
        %1616 = vmatprep.subr.bf16.mxu0 0
        %1617 = vmatpush1.bf16.msra.mxu0 0
        %1618 = vmatprep.subr.bf16.mxu0 0
        %1619 = vmatpush1.bf16.msra.mxu0 0
        %1620 = vmatprep.subr.bf16.mxu0 0
        %1621 = vmatpush1.bf16.msra.mxu0 0
        %1622 = vmatprep.subr.bf16.mxu0 0
        %1623 = vmatpush1.bf16.msra.mxu0 0
        %1624 = vmatprep.subr.bf16.mxu0 0
        %1625 = vmatpush1.bf16.msra.mxu0 0
        %1626 = vmatprep.subr.bf16.mxu0 0
        %1627 = vmatpush1.bf16.msra.mxu0 0
        %1628 = vmatprep.subr.bf16.mxu0 0
        %1629 = vmatpush1.bf16.msra.mxu0 0
        %1630 = vmatprep.mubr.bf16.mxu0 0
        %1631 = vmatmul.mubr.bf16.gmra.mrb[0].mxu0 %v1596
        %v1632 = vpop.f32.mrb[0].mxu0
        %v1633 = vadd.f32 0.0, %v1632
        %v1634 = vpop.f32.mrb[0].mxu0
        %v1635 = vadd.f32 0.0, %v1634
        %v1636 = vpop.f32.mrb[0].mxu0
        %v1637 = vadd.f32 0.0, %v1636
        %v1638 = vpop.f32.mrb[0].mxu0
        %v1639 = vadd.f32 0.0, %v1638
        %1640 = vdwg.mxu0
        %vm1641 = vmand %vm1059, %vm1083
        %vm1642 = vmand %vm1060, %vm1084
        %v1643 = vsel %vm1641, 1, 0
        %v1644 = vsel %vm1642, 1, 0
        %vm1645 = vcmp.eq.s32.totalorder %v1643, 1
        %vm1646 = vcmp.eq.s32.totalorder %v1644, 1
        %v1647 = vsel %vm1645, %v1633, 0.0
        %v1648 = vsel %vm1646, %v1635, 0.0
        %v1649 = vsel %vm1645, %v1637, 0.0
        %v1650 = vsel %vm1646, %v1639, 0.0
        %v1651 = vadd.f32 %v1583, %v1647
        %v1652 = vadd.f32 %v1584, %v1648
        %v1653 = vadd.f32 %v1585, %v1649
        %v1654 = vadd.f32 %v1586, %v1650
        %s1655 = scalar_lea.vmem [#allocation2], 128
        %v1656 = vld [vmem:[%s1655] sm:$0xf]
        %v1657 = vld [vmem:[%s1655 + $0x4] sm:$0xf]
        %v1660 = vunpack.c.l.b16 %v1656
        %v1661 = vunpack.c.l.b16 %v1657
        %v1662 = vpack.c.b16 %v1661, %v1660
        %v1664 = vsel %vm309, %v1662, 0
        %1666 = vmatprep.subr.bf16.mxu0 %v1191
        %1667 = vmatpush1.bf16.msra.mxu0 %v1184
        %1668 = vmatprep.subr.bf16.mxu0 %v1195
        %1669 = vmatpush1.bf16.msra.mxu0 %v1185
        %1670 = vmatprep.subr.bf16.mxu0 0
        %1671 = vmatpush1.bf16.msra.mxu0 0
        %1672 = vmatprep.subr.bf16.mxu0 0
        %1673 = vmatpush1.bf16.msra.mxu0 0
        %1674 = vmatprep.subr.bf16.mxu0 0
        %1675 = vmatpush1.bf16.msra.mxu0 0
        %1676 = vmatprep.subr.bf16.mxu0 0
        %1677 = vmatpush1.bf16.msra.mxu0 0
        %1678 = vmatprep.subr.bf16.mxu0 0
        %1679 = vmatpush1.bf16.msra.mxu0 0
        %1680 = vmatprep.subr.bf16.mxu0 0
        %1681 = vmatpush1.bf16.msra.mxu0 0
        %1682 = vmatprep.subr.bf16.mxu0 0
        %1683 = vmatpush1.bf16.msra.mxu0 0
        %1684 = vmatprep.subr.bf16.mxu0 0
        %1685 = vmatpush1.bf16.msra.mxu0 0
        %1686 = vmatprep.subr.bf16.mxu0 0
        %1687 = vmatpush1.bf16.msra.mxu0 0
        %1688 = vmatprep.subr.bf16.mxu0 0
        %1689 = vmatpush1.bf16.msra.mxu0 0
        %1690 = vmatprep.subr.bf16.mxu0 0
        %1691 = vmatpush1.bf16.msra.mxu0 0
        %1692 = vmatprep.subr.bf16.mxu0 0
        %1693 = vmatpush1.bf16.msra.mxu0 0
        %1694 = vmatprep.subr.bf16.mxu0 0
        %1695 = vmatpush1.bf16.msra.mxu0 0
        %1696 = vmatprep.subr.bf16.mxu0 0
        %1697 = vmatpush1.bf16.msra.mxu0 0
        %1698 = vmatprep.mubr.bf16.mxu0 0
        %1699 = vmatmul.mubr.bf16.gmra.mrb[0].mxu0 %v1664
        %v1700 = vpop.f32.mrb[0].mxu0
        %v1701 = vadd.f32 0.0, %v1700
        %v1702 = vpop.f32.mrb[0].mxu0
        %v1703 = vadd.f32 0.0, %v1702
        %v1704 = vpop.f32.mrb[0].mxu0
        %v1705 = vadd.f32 0.0, %v1704
        %v1706 = vpop.f32.mrb[0].mxu0
        %v1707 = vadd.f32 0.0, %v1706
        %1708 = vdwg.mxu0
        %v1709 = vsel %vm1083, 1, 0
        %v1710 = vsel %vm1084, 1, 0
        %vm1711 = vcmp.eq.s32.totalorder %v1709, 1
        %vm1712 = vcmp.eq.s32.totalorder %v1710, 1
        %v1713 = vsel %vm1711, %v1701, 0.0
        %v1714 = vsel %vm1712, %v1703, 0.0
        %v1715 = vsel %vm1711, %v1705, 0.0
        %v1716 = vsel %vm1712, %v1707, 0.0
        %v1717 = vadd.f32 %v1651, %v1713
        %v1718 = vadd.f32 %v1652, %v1714
        %v1719 = vadd.f32 %v1653, %v1715
        %v1720 = vadd.f32 %v1654, %v1716
        %s1721 = scalar_lea.vmem [#allocation2], 136
        %v1722 = vld [vmem:[%s1721] sm:$0xf]
        %v1723 = vld [vmem:[%s1721 + $0x4] sm:$0xf]
        %v1726 = vunpack.c.l.b16 %v1722
        %v1727 = vunpack.c.l.b16 %v1723
        %v1728 = vpack.c.b16 %v1727, %v1726
        %v1730 = vsel %vm309, %v1728, 0
        %1732 = vmatprep.subr.bf16.mxu0 %v1279
        %1733 = vmatpush1.bf16.msra.mxu0 %v1272
        %1734 = vmatprep.subr.bf16.mxu0 %v1283
        %1735 = vmatpush1.bf16.msra.mxu0 %v1273
        %1736 = vmatprep.subr.bf16.mxu0 0
        %1737 = vmatpush1.bf16.msra.mxu0 0
        %1738 = vmatprep.subr.bf16.mxu0 0
        %1739 = vmatpush1.bf16.msra.mxu0 0
        %1740 = vmatprep.subr.bf16.mxu0 0
        %1741 = vmatpush1.bf16.msra.mxu0 0
        %1742 = vmatprep.subr.bf16.mxu0 0
        %1743 = vmatpush1.bf16.msra.mxu0 0
        %1744 = vmatprep.subr.bf16.mxu0 0
        %1745 = vmatpush1.bf16.msra.mxu0 0
        %1746 = vmatprep.subr.bf16.mxu0 0
        %1747 = vmatpush1.bf16.msra.mxu0 0
        %1748 = vmatprep.subr.bf16.mxu0 0
        %1749 = vmatpush1.bf16.msra.mxu0 0
        %1750 = vmatprep.subr.bf16.mxu0 0
        %1751 = vmatpush1.bf16.msra.mxu0 0
        %1752 = vmatprep.subr.bf16.mxu0 0
        %1753 = vmatpush1.bf16.msra.mxu0 0
        %1754 = vmatprep.subr.bf16.mxu0 0
        %1755 = vmatpush1.bf16.msra.mxu0 0
        %1756 = vmatprep.subr.bf16.mxu0 0
        %1757 = vmatpush1.bf16.msra.mxu0 0
        %1758 = vmatprep.subr.bf16.mxu0 0
        %1759 = vmatpush1.bf16.msra.mxu0 0
        %1760 = vmatprep.subr.bf16.mxu0 0
        %1761 = vmatpush1.bf16.msra.mxu0 0
        %1762 = vmatprep.subr.bf16.mxu0 0
        %1763 = vmatpush1.bf16.msra.mxu0 0
        %1764 = vmatprep.mubr.bf16.mxu0 0
        %1765 = vmatmul.mubr.bf16.gmra.mrb[0].mxu0 %v1730
        %v1766 = vpop.f32.mrb[0].mxu0
        %v1767 = vadd.f32 0.0, %v1766
        %v1768 = vpop.f32.mrb[0].mxu0
        %v1769 = vadd.f32 0.0, %v1768
        %v1770 = vpop.f32.mrb[0].mxu0
        %v1771 = vadd.f32 0.0, %v1770
        %v1772 = vpop.f32.mrb[0].mxu0
        %v1773 = vadd.f32 0.0, %v1772
        %1774 = vdwg.mxu0
        %vm1775 = vmand %vm1067, %vm1083
        %vm1776 = vmand %vm1068, %vm1084
        %v1777 = vsel %vm1775, 1, 0
        %v1778 = vsel %vm1776, 1, 0
        %vm1779 = vcmp.eq.s32.totalorder %v1777, 1
        %vm1780 = vcmp.eq.s32.totalorder %v1778, 1
        %v1781 = vsel %vm1779, %v1767, 0.0
        %v1782 = vsel %vm1780, %v1769, 0.0
        %v1783 = vsel %vm1779, %v1771, 0.0
        %v1784 = vsel %vm1780, %v1773, 0.0
        %v1785 = vadd.f32 %v1717, %v1781
        %v1786 = vadd.f32 %v1718, %v1782
        %v1787 = vadd.f32 %v1719, %v1783
        %v1788 = vadd.f32 %v1720, %v1784
        %v1789 = vld [vmem:[%s3] sm:$0xff]
        %v1790 = vld [vmem:[%s3 + $0x8] sm:$0xff]
        %1792 = vset.pattern.permute.xlu0 0
        %1793 = vperm.xlu0 %1792, %v1789
        %v1794 = vpop.permute.xlu0 %1793
        %1797 = vset.pattern.permute.xlu0 0
        %1798 = vperm.xlu0 %1797, %v1790
        %v1799 = vpop.permute.xlu0 %1798
        %v1801 = vadd.f32 %v1049, %v1794
        %v1802 = vadd.f32 %v1050, %v1794
        %v1803 = vadd.f32 %v1051, %v1799
        %v1804 = vadd.f32 %v1052, %v1799
        %vm1805 = vcmp.ge.f32.partialorder %v1801, 0.0
        %vm1806 = vcmp.ge.f32.partialorder %v1802, 0.0
        %vm1807 = vcmp.ge.f32.partialorder %v1803, 0.0
        %vm1808 = vcmp.ge.f32.partialorder %v1804, 0.0
        %s1809 = scalar_lea.vmem %s3, 16
        %v1810 = vld [vmem:[%s1809] sm:$0xff]
        %v1811 = vld [vmem:[%s1809 + $0x8] sm:$0xff]
        %1813 = vset.pattern.permute.xlu0 0
        %1814 = vperm.xlu0 %1813, %v1810
        %v1815 = vpop.permute.xlu0 %1814
        %1818 = vset.pattern.permute.xlu0 0
        %1819 = vperm.xlu0 %1818, %v1811
        %v1820 = vpop.permute.xlu0 %1819
        %v1822 = vmul.f32 %v1815, %v1801
        %v1823 = vmul.f32 %v1815, %v1802
        %v1824 = vmul.f32 %v1820, %v1803
        %v1825 = vmul.f32 %v1820, %v1804
        %v1826 = vsel %vm1805, %v1801, %v1822
        %v1827 = vsel %vm1806, %v1802, %v1823
        %v1828 = vsel %vm1807, %v1803, %v1824
        %v1829 = vsel %vm1808, %v1804, %v1825
        %s1830 = scalar_lea.vmem %s3, 32
        %v1831 = vld [vmem:[%s1830] sm:$0xff]
        %v1832 = vld [vmem:[%s1830 + $0x8] sm:$0xff]
        %1834 = vset.pattern.permute.xlu0 0
        %1835 = vperm.xlu0 %1834, %v1831
        %v1836 = vpop.permute.xlu0 %1835
        %1839 = vset.pattern.permute.xlu0 0
        %1840 = vperm.xlu0 %1839, %v1832
        %v1841 = vpop.permute.xlu0 %1840
        %v1843 = vadd.f32 %v1785, %v1836
        %v1844 = vadd.f32 %v1786, %v1836
        %v1845 = vadd.f32 %v1787, %v1841
        %v1846 = vadd.f32 %v1788, %v1841
        %vm1847 = vcmp.ge.f32.partialorder %v1843, 0.0
        %vm1848 = vcmp.ge.f32.partialorder %v1844, 0.0
        %vm1849 = vcmp.ge.f32.partialorder %v1845, 0.0
        %vm1850 = vcmp.ge.f32.partialorder %v1846, 0.0
        %s1851 = scalar_lea.vmem %s3, 48
        %v1852 = vld [vmem:[%s1851] sm:$0xff]
        %v1853 = vld [vmem:[%s1851 + $0x8] sm:$0xff]
        %1855 = vset.pattern.permute.xlu0 0
        %1856 = vperm.xlu0 %1855, %v1852
        %v1857 = vpop.permute.xlu0 %1856
        %1860 = vset.pattern.permute.xlu0 0
        %1861 = vperm.xlu0 %1860, %v1853
        %v1862 = vpop.permute.xlu0 %1861
        %v1864 = vmul.f32 %v1857, %v1843
        %v1865 = vmul.f32 %v1857, %v1844
        %v1866 = vmul.f32 %v1862, %v1845
        %v1867 = vmul.f32 %v1862, %v1846
        %v1868 = vsel %vm1847, %v1843, %v1864
        %v1869 = vsel %vm1848, %v1844, %v1865
        %v1870 = vsel %vm1849, %v1845, %v1866
        %v1871 = vsel %vm1850, %v1846, %v1867
        %v1872 = vld [vmem:[%s2] sm:$0xf]
        %v1873 = vld [vmem:[%s2 + $0x4] sm:$0xf]
        %v1874 = vld [vmem:[%s2 + $0x8] sm:$0xf]
        %v1875 = vld [vmem:[%s2 + $0xc] sm:$0xf]
        %v1876 = vpack.c.bf16 %v1828, %v1826
        %v1877 = vpack.c.bf16 %v1829, %v1827
        %s1878 = scalar_lea.vmem %s2, 16
        %v1879 = vld [vmem:[%s1878] sm:$0xf]
        %v1880 = vld [vmem:[%s1878 + $0x4] sm:$0xf]
        %v1881 = vld [vmem:[%s1878 + $0x8] sm:$0xf]
        %v1882 = vld [vmem:[%s1878 + $0xc] sm:$0xf]
        %v1883 = vpack.c.bf16 %v1870, %v1868
        %v1884 = vpack.c.bf16 %v1871, %v1869
        %v1889 = vunpack.c.l.b16 %v1879
        %v1890 = vunpack.c.l.b16 %v1880
        %v1891 = vunpack.c.l.b16 %v1881
        %v1892 = vunpack.c.l.b16 %v1882
        %v1893 = vpack.c.b16 %v1890, %v1889
        %v1894 = vpack.c.b16 %v1892, %v1891
        %vm1895 = vcmask 130048
        %v1897 = vsel %vm1895, %v1893, 0
        %v1900 = vsel %vm1895, %v1894, 0
        %1902 = vmatprep.subr.bf16.mxu0 %v1884
        %1903 = vmatpush1.bf16.msra.mxu0 %v1883
        %1904 = vmatprep.subr.bf16.mxu0 0
        %1905 = vmatpush1.bf16.msra.mxu0 0
        %1906 = vmatprep.subr.bf16.mxu0 0
        %1907 = vmatpush1.bf16.msra.mxu0 0
        %1908 = vmatprep.subr.bf16.mxu0 0
        %1909 = vmatpush1.bf16.msra.mxu0 0
        %1910 = vmatprep.subr.bf16.mxu0 0
        %1911 = vmatpush1.bf16.msra.mxu0 0
        %1912 = vmatprep.subr.bf16.mxu0 0
        %1913 = vmatpush1.bf16.msra.mxu0 0
        %1914 = vmatprep.subr.bf16.mxu0 0
        %1915 = vmatpush1.bf16.msra.mxu0 0
        %1916 = vmatprep.subr.bf16.mxu0 0
        %1917 = vmatpush1.bf16.msra.mxu0 0
        %1918 = vmatprep.subr.bf16.mxu0 0
        %1919 = vmatpush1.bf16.msra.mxu0 0
        %1920 = vmatprep.subr.bf16.mxu0 0
        %1921 = vmatpush1.bf16.msra.mxu0 0
        %1922 = vmatprep.subr.bf16.mxu0 0
        %1923 = vmatpush1.bf16.msra.mxu0 0
        %1924 = vmatprep.subr.bf16.mxu0 0
        %1925 = vmatpush1.bf16.msra.mxu0 0
        %1926 = vmatprep.subr.bf16.mxu0 0
        %1927 = vmatpush1.bf16.msra.mxu0 0
        %1928 = vmatprep.subr.bf16.mxu0 0
        %1929 = vmatpush1.bf16.msra.mxu0 0
        %1930 = vmatprep.subr.bf16.mxu0 0
        %1931 = vmatpush1.bf16.msra.mxu0 0
        %1932 = vmatprep.subr.bf16.mxu0 0
        %1933 = vmatpush1.bf16.msra.mxu0 0
        %1934 = vmatprep.mubr.bf16.mxu0 0
        %1935 = vmatmul.mubr.bf16.gmra.mrb[0].mxu0 %v1897
        %v1936 = vpop.f32.mrb[0].mxu0
        %v1937 = vadd.f32 0.0, %v1936
        %v1938 = vpop.f32.mrb[0].mxu0
        %v1939 = vadd.f32 0.0, %v1938
        %v1940 = vpop.f32.mrb[0].mxu0
        %v1941 = vadd.f32 0.0, %v1940
        %v1942 = vpop.f32.mrb[0].mxu0
        %v1943 = vadd.f32 0.0, %v1942
        %1944 = vmatprep.mubr.bf16.mxu0 0
        %1945 = vmatmul.mubr.bf16.gmra.mrb[0].mxu0 %v1900
        %v1946 = vpop.f32.mrb[0].mxu0
        %v1947 = vadd.f32 0.0, %v1946
        %v1948 = vpop.f32.mrb[0].mxu0
        %v1949 = vadd.f32 0.0, %v1948
        %v1950 = vpop.f32.mrb[0].mxu0
        %v1951 = vadd.f32 0.0, %v1950
        %v1952 = vpop.f32.mrb[0].mxu0
        %v1953 = vadd.f32 0.0, %v1952
        %1954 = vdwg.mxu0
        %v1959 = vunpack.c.l.b16 %v1872
        %v1960 = vunpack.c.l.b16 %v1873
        %v1961 = vunpack.c.l.b16 %v1874
        %v1962 = vunpack.c.l.b16 %v1875
        %v1963 = vpack.c.b16 %v1960, %v1959
        %v1964 = vpack.c.b16 %v1962, %v1961
        %v1966 = vsel %vm1895, %v1963, 0
        %v1969 = vsel %vm1895, %v1964, 0
        %1971 = vmatprep.subr.bf16.mxu0 %v1877
        %1972 = vmatpush1.bf16.msra.mxu0 %v1876
        %1973 = vmatprep.subr.bf16.mxu0 0
        %1974 = vmatpush1.bf16.msra.mxu0 0
        %1975 = vmatprep.subr.bf16.mxu0 0
        %1976 = vmatpush1.bf16.msra.mxu0 0
        %1977 = vmatprep.subr.bf16.mxu0 0
        %1978 = vmatpush1.bf16.msra.mxu0 0
        %1979 = vmatprep.subr.bf16.mxu0 0
        %1980 = vmatpush1.bf16.msra.mxu0 0
        %1981 = vmatprep.subr.bf16.mxu0 0
        %1982 = vmatpush1.bf16.msra.mxu0 0
        %1983 = vmatprep.subr.bf16.mxu0 0
        %1984 = vmatpush1.bf16.msra.mxu0 0
        %1985 = vmatprep.subr.bf16.mxu0 0
        %1986 = vmatpush1.bf16.msra.mxu0 0
        %1987 = vmatprep.subr.bf16.mxu0 0
        %1988 = vmatpush1.bf16.msra.mxu0 0
        %1989 = vmatprep.subr.bf16.mxu0 0
        %1990 = vmatpush1.bf16.msra.mxu0 0
        %1991 = vmatprep.subr.bf16.mxu0 0
        %1992 = vmatpush1.bf16.msra.mxu0 0
        %1993 = vmatprep.subr.bf16.mxu0 0
        %1994 = vmatpush1.bf16.msra.mxu0 0
        %1995 = vmatprep.subr.bf16.mxu0 0
        %1996 = vmatpush1.bf16.msra.mxu0 0
        %1997 = vmatprep.subr.bf16.mxu0 0
        %1998 = vmatpush1.bf16.msra.mxu0 0
        %1999 = vmatprep.subr.bf16.mxu0 0
        %2000 = vmatpush1.bf16.msra.mxu0 0
        %2001 = vmatprep.subr.bf16.mxu0 0
        %2002 = vmatpush1.bf16.msra.mxu0 0
        %2003 = vmatprep.mubr.bf16.mxu0 0
        %2004 = vmatmul.mubr.bf16.gmra.mrb[0].mxu0 %v1966
        %v2005 = vpop.f32.mrb[0].mxu0
        %v2006 = vadd.f32 %v1937, %v2005
        %v2007 = vpop.f32.mrb[0].mxu0
        %v2008 = vadd.f32 %v1939, %v2007
        %v2009 = vpop.f32.mrb[0].mxu0
        %v2010 = vadd.f32 %v1941, %v2009
        %v2011 = vpop.f32.mrb[0].mxu0
        %v2012 = vadd.f32 %v1943, %v2011
        %2013 = vmatprep.mubr.bf16.mxu0 0
        %2014 = vmatmul.mubr.bf16.gmra.mrb[0].mxu0 %v1969
        %v2015 = vpop.f32.mrb[0].mxu0
        %v2016 = vadd.f32 %v1947, %v2015
        %v2017 = vpop.f32.mrb[0].mxu0
        %v2018 = vadd.f32 %v1949, %v2017
        %v2019 = vpop.f32.mrb[0].mxu0
        %v2020 = vadd.f32 %v1951, %v2019
        %v2021 = vpop.f32.mrb[0].mxu0
        %v2022 = vadd.f32 %v1953, %v2021
        %2023 = vdwg.mxu0
        %v2024 = vxor.u32 %v2006, 2147483648
        %v2025 = vxor.u32 %v2008, 2147483648
        %v2026 = vxor.u32 %v2010, 2147483648
        %v2027 = vxor.u32 %v2012, 2147483648
        %v2028 = vxor.u32 %v2016, 2147483648
        %v2029 = vxor.u32 %v2018, 2147483648
        %v2030 = vxor.u32 %v2020, 2147483648
        %v2031 = vxor.u32 %v2022, 2147483648
        %v2032 = vmul.f32 %v2024, 1.442695
        %v2033 = vpow.pop %v2032
        %v2034 = vmul.f32 %v2025, 1.442695
        %v2035 = vpow.pop %v2034
        %v2036 = vmul.f32 %v2026, 1.442695
        %v2037 = vpow.pop %v2036
        %v2038 = vmul.f32 %v2027, 1.442695
        %v2039 = vpow.pop %v2038
        %v2040 = vmul.f32 %v2028, 1.442695
        %v2041 = vpow.pop %v2040
        %v2042 = vmul.f32 %v2029, 1.442695
        %v2043 = vpow.pop %v2042
        %v2044 = vmul.f32 %v2030, 1.442695
        %v2045 = vpow.pop %v2044
        %v2046 = vmul.f32 %v2031, 1.442695
        %v2047 = vpow.pop %v2046
        %v2048 = vadd.f32 %v2033, 1.0
        %v2049 = vadd.f32 %v2035, 1.0
        %v2050 = vadd.f32 %v2037, 1.0
        %v2051 = vadd.f32 %v2039, 1.0
        %v2052 = vadd.f32 %v2041, 1.0
        %v2053 = vadd.f32 %v2043, 1.0
        %v2054 = vadd.f32 %v2045, 1.0
        %v2055 = vadd.f32 %v2047, 1.0
        %v2056 = vrcp.pop %v2048
        %v2057 = vmul.f32 1.0, %v2056
        %v2058 = vrcp.pop %v2049
        %v2059 = vmul.f32 1.0, %v2058
        %v2060 = vrcp.pop %v2050
        %v2061 = vmul.f32 1.0, %v2060
        %v2062 = vrcp.pop %v2051
        %v2063 = vmul.f32 1.0, %v2062
        %v2064 = vrcp.pop %v2052
        %v2065 = vmul.f32 1.0, %v2064
        %v2066 = vrcp.pop %v2053
        %v2067 = vmul.f32 1.0, %v2066
        %v2068 = vrcp.pop %v2054
        %v2069 = vmul.f32 1.0, %v2068
        %v2070 = vrcp.pop %v2055
        %v2071 = vmul.f32 1.0, %v2070
        %2072 = vst [vmem:[%s205] sm:$0xff] %v2057
        %2073 = vst [vmem:[%s205 + $0x8] sm:$0xff] %v2059
        %2074 = vst [vmem:[%s205 + $0x10] sm:$0xff] %v2061
        %2075 = vst [vmem:[%s205 + $0x18] sm:$0xff] %v2063
        %2076 = vst [vmem:[%s205 + $0x20] sm:$0xff] %v2065
        %2077 = vst [vmem:[%s205 + $0x28] sm:$0xff] %v2067
        %2078 = vst [vmem:[%s205 + $0x30] sm:$0xff] %v2069
        %2079 = vst [vmem:[%s205 + $0x38] sm:$0xff] %v2071
        %s2080 = sand.u32 %s116, 1
        %s2081 = scalar_lea.sflag [#allocation4], %s2080
        %s2082 = sand.u32 %s116, 1
        %s2083 = smul.addr %s2082, 64
        %s2084 = scalar_lea.vmem [#allocation5], %s2083
        // Predicated region
        $region41: #{tpu_custom_call.1} parent=35 // pred_check
          %p2085 = pneg %p126
        $region42: #{tpu_custom_call.1} parent=35 // pred_check_branch
          %2087 = sbr.rel (%p2085) target = $region44
        $region43: #{tpu_custom_call.1} parent=35 // pred_region
          %s2089 = ssub.s32 1024, 1024
          %2090 = vsyncadd %s2081, %s2089
          %s2091 = smul.addr %s19, 8
          %s2092 = smul.addr %s2091, 128
          %s2093 = scalar_lea.hbm %s4, %s2092
          %s2094 = sshll.u32 %s2084, 4
          %s2095 = int_to_ptr.vmem [resolvable:$true] %s2094
          %2100 = dma.vmem_to_hbm [thread:$0]  %s2095, 1024, %s2093, %s2081, 256, 256, 16
        $region44: #{tpu_custom_call.1} parent=35 // pred_fallthru
          _
      $region36: #{tpu_custom_call.1} parent=5 // pred_fallthru
        _
      %p2101 = scmp.le.s32.totalorder 2, %s14
      // Predicated region
      $region45: #{tpu_custom_call.1} parent=5 // pred_check
        %p2102 = pneg %p2101
      $region46: #{tpu_custom_call.1} parent=5 // pred_check_branch
        %2104 = sbr.rel (%p2102) target = $region48
      $region47: #{tpu_custom_call.1} parent=5 // pred_region
        %s2105 = ssub.s32 %s14, 2
        // Predicated region
        $region49: #{tpu_custom_call.1} parent=47 // pred_check
          %p2106 = pneg %p132
        $region50: #{tpu_custom_call.1} parent=47 // pred_check_branch
          %2108 = sbr.rel (%p2106) target = $region52
        $region51: #{tpu_custom_call.1} parent=47 // pred_region
          %s2109 = sand.u32 %s117, 1
          %s2110 = scalar_lea.sflag [#allocation4], %s2109
          %s2111 = sand.u32 %s117, 1
          %s2112 = smul.addr %s2111, 64
          %s2113 = scalar_lea.vmem [#allocation5], %s2112
          %2114 = dma.done %s2110, 1024
        $region52: #{tpu_custom_call.1} parent=47 // pred_fallthru
          _
      $region48: #{tpu_custom_call.1} parent=5 // pred_fallthru
        _
    $region6: #{tpu_custom_call.1} parent=1 // loop_footer
      %s18 = sadd.s32 1, %s14
    $region7: #{tpu_custom_call.1} parent=1 // loop_footer_branch
      %13 = sbr.rel target = $region3
    $region8: #{tpu_custom_call.1} parent=1 // loop_exit
      _
    %2115 = vsyncpa [#allocation3], 1
    %s2116 = scalar_lea.sflag [#allocation3], 1
    %2117 = vsyncpa %s2116, 1
    %2118 = vsyncpa [#allocation4], 1
    %s2119 = scalar_lea.sflag [#allocation4], 1
    %2120 = vsyncpa %s2119, 1

</llo_original>
